<compile_context>
chip_gen: v7x
topology: tpu7x:2x2x1
jax: 0.10.0
libtpu: 0.0.40
codegen_flags: <defaults>
</compile_context>

<pallas_src>
import jax
import jax.numpy as jnp
import numpy as np
from jax import lax
from jax.experimental import pallas as pl
from jax.experimental.pallas import tpu as pltpu

EPS = 1e-5
_NEG = -1e30      # "-inf" stand-in for the maxpool border (avoids inf*0 = NaN)


# ----------------------------------------------------------------------------
# kernel
# ----------------------------------------------------------------------------
def _make_kernel(H, W, ho, tr, wo, cin, cproj):
    """Kernel body with all static shape parameters closed over."""
    h_odd = (H % 2 == 1)
    w_odd = (W % 2 == 1)

    def kernel(planes_ref, halo_ref, w_ref, bpj_ref, smp_ref, bmp_ref,
               ext_ref, main_ref):
        r = pl.program_id(1)                        # row-tile index

        blk = planes_ref[...]                       # (4, tr, wo+1, cin)
        halo = halo_ref[...]                        # (2, wo+1, cin)
        wall = w_ref[...]                           # (9, cin, cproj)
        neg = jnp.asarray(_NEG, blk.dtype)

        # phase planes: index = 2*row_parity + col_parity
        p00, p01, p10, p11 = blk[0], blk[1], blk[2], blk[3]
        # di=2 row source: row-parity-0 planes shifted up by one row with the
        # halo row appended.  Concat is along the leading (untiled) dim only:
        # whole-(8,128)-tile copies, no lane/sublane shuffle.
        if tr > 1:
            p20 = jnp.concatenate([p00[1:], halo[0:1]], axis=0)
            p21 = jnp.concatenate([p01[1:], halo[1:2]], axis=0)
        else:
            p20, p21 = halo[0:1], halo[1:2]
        row_src = ((p00, p01), (p10, p11), (p20, p21))

        # Border masks for the maxpool (-inf padding) branch: iota + where.
        grow = r * tr + lax.broadcasted_iota(jnp.int32, (tr, wo, 1), 0)
        gcol = lax.broadcasted_iota(jnp.int32, (tr, wo, 1), 1)
        top_m = grow == 0
        bot_m = grow == (ho - 1)
        left_m = gcol == 0
        right_m = gcol == (wo - 1)

        mp = None
        acc = jnp.zeros((tr * wo, cproj), jnp.float32)
        for di in range(3):
            for dj in range(3):
                pc0, pc1 = row_src[di]
                if dj == 1:
                    v = pc1[:, 0:wo, :]
                elif dj == 0:
                    v = pc0[:, 0:wo, :]
                else:                               # dj == 2
                    v = pc0[:, 1:wo + 1, :]
                # main branch: folded dw3x3*dwBN*1x1*retBN per-tap matmul
                # (MXU, default precision, f32 accumulation).
                acc = acc + jnp.dot(v.reshape(tr * wo, cin),
                                    wall[3 * di + dj],
                                    preferred_element_type=jnp.float32)
                # ext branch: mask pad taps to -1e30 then running max.
                vm = v
                if di == 0:
                    vm = jnp.where(top_m, neg, vm)
                if di == 2 and h_odd:
                    vm = jnp.where(bot_m, neg, vm)
                if dj == 0:
                    vm = jnp.where(left_m, neg, vm)
                if dj == 2 and w_odd:
                    vm = jnp.where(right_m, neg, vm)
                mp = vm if mp is None else jnp.maximum(mp, vm)

        # Epilogue (ret_bn + relu) in f32; each output stored lane-dense at
        # channel offset 0.
        ext_ref[...] = jnp.maximum(
            mp.astype(jnp.float32) * smp_ref[...] + bmp_ref[...], 0.0)
        main_ref[...] = jnp.maximum(
            acc.reshape(tr, wo, cproj) + bpj_ref[...], 0.0)

    return kernel


# ----------------------------------------------------------------------------
# wrapper helpers
# ----------------------------------------------------------------------------
def _round_up(v, m):
    return -(-v // m) * m


def _vmem_plan():
    """Generation-aware (tile_budget_bytes, vmem_limit_bytes)."""
    cap = None
    try:
        cap = int(pltpu.get_tpu_info().vmem_capacity_bytes)
    except Exception:
        cap = None
    if cap is not None and cap >= 100 * 1024 * 1024:       # v5e / v6e (128 MiB)
        return 24 * 1024 * 1024, 96 * 1024 * 1024
    return 12 * 1024 * 1024, 48 * 1024 * 1024               # v7x (64 MiB) / unknown


def _choose_tiling(ho, wo, cin, cproj, n, compute_dtype, tile_budget):
    """Pick the row-tile size tr so the real (lane-padded) VMEM footprint,
    including double-buffered I/O and kernel intermediates, stays in budget."""
    sub, lane = 8, 128
    ccd = jnp.dtype(compute_dtype).itemsize
    ci_l = _round_up(cin, lane)
    cm_l = _round_up(max(cin, cproj), lane)
    co_l = _round_up(cin, lane) + _round_up(cproj, lane)
    row_in = 4 * _round_up(wo + 1, sub) * ci_l * ccd         # stacked plane block
    row_out = _round_up(wo, sub) * co_l * 4                  # ext + main tiles (f32)
    row_tmp = _round_up(wo, sub) * (10 * ci_l * ccd + 3 * cm_l * 4)
    per_row = 2 * (row_in + row_out) + row_tmp               # dbl-buffered I/O + temps
    tr = int(max(1, min(ho, (tile_budget * 9 // 10) // per_row)))
    if tr > 8:
        tr -= tr % 8
    # keep >= 2 grid points so v7x megacore can shard the grid
    if n * (-(-ho // tr)) < 2 and ho > 1:
        tr = -(-ho // 2)
    n_tiles = -(-ho // tr)
    return tr, n_tiles


# ----------------------------------------------------------------------------
# public forward
# ----------------------------------------------------------------------------
def downsampling_block_v2(x_nchw, params, *, compute_dtype=jnp.float32,
                          tile_vmem_bytes=None):
    # TODO(synk): BatchNorm uses inference (running-stats) semantics; PyTorch
    # train-mode batch statistics are not reproduced.
    n, cin, H, W = x_nchw.shape
    cproj = params["proj_w"].shape[0]
    assert cproj >= 1
    ho = (H - 1) // 2 + 1
    wo = (W - 1) // 2 + 1

    tile_budget, vmem_limit = _vmem_plan()
    if tile_vmem_bytes is not None:
        tile_budget = int(tile_vmem_bytes)
    tr, n_tiles = _choose_tiling(ho, wo, cin, cproj, n, compute_dtype,
                                 tile_budget)
    ho_pad = n_tiles * tr

    # ---- one zero-padded copy of the input, space-to-depth into 4 stride-2
    # phase planes stacked along one leading axis (one input DMA per step) ---
    x = jnp.transpose(x_nchw, (0, 2, 3, 1)).astype(compute_dtype)       # NHWC
    # NOTE: in the bf16 path the maxpool / masking happen in bf16 (inputs are
    # rounded once); the epilogue and matmul accumulation stay in f32.
    pad_b = 2 * ho_pad + 1 - H
    pad_r = 2 * wo + 1 - W
    xp = jnp.pad(x, ((0, 0), (1, pad_b), (1, pad_r), (0, 0)))
    xp = xp.reshape(n, ho_pad + 1, 2, wo + 1, 2, cin)
    planes = jnp.transpose(xp, (0, 2, 4, 1, 3, 5)).reshape(
        n, 4, ho_pad + 1, wo + 1, cin)                # plane idx = 2*rp + cp
    # tiny per-tile halo: row (r+1)*tr of the two row-parity-0 planes
    halo = jnp.transpose(planes[:, 0:2, tr::tr], (0, 2, 1, 3, 4))
    # halo shape: (n, n_tiles, 2, wo+1, cin)

    # ---- fold dw-BN, 1x1 projection and ret-BN into one weight + bias ------
    f32 = jnp.float32
    dw_scale = params["dw_gamma"] / jnp.sqrt(params["dw_var"] + EPS)     # (cin,)
    dw_bias = params["dw_beta"] - params["dw_mean"] * dw_scale           # (cin,)
    rs = params["ret_gamma"] / jnp.sqrt(params["ret_var"] + EPS)         # (cout,)
    rb = params["ret_beta"] - params["ret_mean"] * rs                    # (cout,)
    rs_mp, rb_mp = rs[:cin], rb[:cin]
    rs_pj, rb_pj = rs[cin:], rb[cin:]

    dww9 = jnp.transpose(params["dw_w"][:, 0], (1, 2, 0)).reshape(9, cin)
    pwm = jnp.transpose(params["proj_w"][:, :, 0, 0], (1, 0))            # (cin, cproj)
    # w_comb[t, c, p] = dw_w[t, c] * dw_scale[c] * pw[c, p] * rs_pj[p]
    w_comb = (dww9[:, :, None] * dw_scale[None, :, None] * pwm[None, :, :]
              * rs_pj[None, None, :]).astype(compute_dtype)              # (9,cin,cproj)
    b_pj = ((dw_bias @ pwm) * rs_pj + rb_pj).astype(f32).reshape(1, cproj)
    smp = rs_mp.astype(f32).reshape(1, cin)
    bmp = rb_mp.astype(f32).reshape(1, cin)

    kernel = _make_kernel(H, W, ho, tr, wo, cin, cproj)

    ext, main = pl.pallas_call(
        kernel,
        out_shape=(jax.ShapeDtypeStruct((n, ho_pad, wo, cin), f32),
                   jax.ShapeDtypeStruct((n, ho_pad, wo, cproj), f32)),
        grid=(n, n_tiles),
        in_specs=[
            pl.BlockSpec((None, 4, tr, wo + 1, cin),
                         lambda b, r: (b, 0, r, 0, 0)),
            pl.BlockSpec((None, None, 2, wo + 1, cin),
                         lambda b, r: (b, r, 0, 0, 0)),
            pl.BlockSpec((9, cin, cproj), lambda b, r: (0, 0, 0)),
            pl.BlockSpec((1, cproj), lambda b, r: (0, 0)),
            pl.BlockSpec((1, cin), lambda b, r: (0, 0)),
            pl.BlockSpec((1, cin), lambda b, r: (0, 0)),
        ],
        out_specs=[
            pl.BlockSpec((None, tr, wo, cin), lambda b, r: (b, r, 0, 0)),
            pl.BlockSpec((None, tr, wo, cproj), lambda b, r: (b, r, 0, 0)),
        ],
        compiler_params=pltpu.CompilerParams(
            dimension_semantics=("parallel", "parallel"),
            vmem_limit_bytes=vmem_limit),
    )(planes, halo, w_comb, b_pj, smp, bmp)

    out = jnp.concatenate([ext[:, :ho], main[:, :ho]], axis=-1)          # NHWC
    return jnp.transpose(out, (0, 3, 1, 2))                              # -> NCHW


# ----------------------------------------------------------------------------
# params / reference
# ----------------------------------------------------------------------------
def make_params(key, in_channels, out_channels):
    cproj = out_channels - in_channels
    ks = jax.random.split(key, 10)
    return {
        # torch layouts: dw_w (Cin,1,3,3), proj_w (Cproj,Cin,1,1)
        "dw_w": 0.3 * jax.random.normal(ks[0], (in_channels, 1, 3, 3), jnp.float32),
        "proj_w": 0.3 * jax.random.normal(ks[1], (cproj, in_channels, 1, 1), jnp.float32),
        "dw_gamma": 1.0 + 0.1 * jax.random.normal(ks[2], (in_channels,), jnp.float32),
        "dw_beta": 0.1 * jax.random.normal(ks[3], (in_channels,), jnp.float32),
        "dw_mean": 0.1 * jax.random.normal(ks[4], (in_channels,), jnp.float32),
        "dw_var": jax.nn.softplus(jax.random.normal(ks[5], (in_channels,), jnp.float32)) + 0.5,
        "ret_gamma": 1.0 + 0.1 * jax.random.normal(ks[6], (out_channels,), jnp.float32),
        "ret_beta": 0.1 * jax.random.normal(ks[7], (out_channels,), jnp.float32),
        "ret_mean": 0.1 * jax.random.normal(ks[8], (out_channels,), jnp.float32),
        "ret_var": jax.nn.softplus(jax.random.normal(ks[9], (out_channels,), jnp.float32)) + 0.5,
    }


def reference(x_nchw, params):
    """Pure-JAX reference (NCHW, eval-mode semantics of the PyTorch module)."""
    cin = x_nchw.shape[1]

    def bn(v, g, b, m, var):
        g = g[None, :, None, None]
        b = b[None, :, None, None]
        m = m[None, :, None, None]
        var = var[None, :, None, None]
        return g * (v - m) / jnp.sqrt(var + EPS) + b

    ext = lax.reduce_window(x_nchw, -jnp.inf, lax.max,
                            (1, 1, 3, 3), (1, 1, 2, 2),
                            ((0, 0), (0, 0), (1, 1), (1, 1)))
    dw = lax.conv_general_dilated(x_nchw, params["dw_w"], (2, 2),
                                  ((1, 1), (1, 1)),
                                  dimension_numbers=("NCHW", "OIHW", "NCHW"),
                                  feature_group_count=cin,
                                  precision=lax.Precision.HIGHEST)
    dw = bn(dw, params["dw_gamma"], params["dw_beta"],
            params["dw_mean"], params["dw_var"])
    proj = lax.conv_general_dilated(dw, params["proj_w"], (1, 1), "VALID",
                                    dimension_numbers=("NCHW", "OIHW", "NCHW"),
                                    precision=lax.Precision.HIGHEST)
    ret = jnp.concatenate([ext, proj], axis=1)
    ret = bn(ret, params["ret_gamma"], params["ret_beta"],
             params["ret_mean"], params["ret_var"])
    return jnp.maximum(ret, 0.0)


# ----------------------------------------------------------------------------
# self-test
# ----------------------------------------------------------------------------
if __name__ == "__main__":
    key = jax.random.PRNGKey(0)
    k1, k2, k3, k4 = jax.random.split(key, 4)

    # even spatial size
    N, C_IN, H, W = 2, 4, 16, 16
    C_OUT = 2 * C_IN
    x = jax.random.normal(k1, (N, C_IN, H, W), jnp.float32)
    params = make_params(k2, C_IN, C_OUT)
    ref = jax.block_until_ready(reference(x, params))

    fwd_f32 = jax.jit(
        lambda a, p: downsampling_block_v2(a, p, compute_dtype=jnp.float32))
    out = jax.block_until_ready(fwd_f32(x, params))
    assert out.shape == (N, C_OUT, H // 2, W // 2), out.shape
    # default MXU precision (no Precision.HIGHEST) -> slightly looser tolerance
    np.testing.assert_allclose(np.asarray(out), np.asarray(ref),
                               rtol=3e-2, atol=3e-2)

    # bfloat16 compute path (half the HBM/DMA bytes, native bf16 MXU)
    fwd_bf16 = jax.jit(
        lambda a, p: downsampling_block_v2(a, p, compute_dtype=jnp.bfloat16))
    out_bf16 = jax.block_until_ready(fwd_bf16(x, params))
    assert out_bf16.shape == (N, C_OUT, H // 2, W // 2), out_bf16.shape
    np.testing.assert_allclose(np.asarray(out_bf16), np.asarray(ref),
                               rtol=1.5e-1, atol=1.5e-1)

    # odd spatial size: exercises the bottom/right -inf border masks and the
    # multi-row-tile (halo) path with non-power-of-two channel counts.
    N2, C_IN2, C_OUT2, H2, W2 = 1, 3, 8, 15, 15
    x2 = jax.random.normal(k3, (N2, C_IN2, H2, W2), jnp.float32)
    params2 = make_params(k4, C_IN2, C_OUT2)
    ref2 = jax.block_until_ready(reference(x2, params2))
    out2 = jax.block_until_ready(fwd_f32(x2, params2))
    assert out2.shape == (N2, C_OUT2, (H2 + 1) // 2, (W2 + 1) // 2), out2.shape
    np.testing.assert_allclose(np.asarray(out2), np.asarray(ref2),
                               rtol=3e-2, atol=3e-2)

    print("KERNEL_OK")
</pallas_src>

<mosaic_0001>
module attributes {stable_mosaic.version = 11 : i64} {
  func.func @kernel(%arg0: i32, %arg1: i32, %arg2: memref<1x4x8x9x4xf32, #tpu.memory_space<vmem>>, %arg3: memref<1x1x2x9x4xf32, #tpu.memory_space<vmem>>, %arg4: memref<9x4x4xf32, #tpu.memory_space<vmem>>, %arg5: memref<1x4xf32, #tpu.memory_space<vmem>>, %arg6: memref<1x4xf32, #tpu.memory_space<vmem>>, %arg7: memref<1x4xf32, #tpu.memory_space<vmem>>, %arg8: memref<1x8x8x4xf32, #tpu.memory_space<vmem>>, %arg9: memref<1x8x8x4xf32, #tpu.memory_space<vmem>>) attributes {dimension_semantics = [#tpu.dimension_semantics<parallel>, #tpu.dimension_semantics<parallel>], iteration_bounds = array<i64: 2, 1>, scalar_prefetch = 0 : i64, scratch_operands = 0 : i64, tpu.core_type = #tpu.core_type<tc>, window_params = [{transform_indices = @transform_0, window_bounds = array<i64: 1, 4, 8, 9, 4>}, {transform_indices = @transform_1, window_bounds = array<i64: 1, 1, 2, 9, 4>}, {pipeline_mode = #tpu.pipeline_mode<synchronous>, transform_indices = @transform_2, window_bounds = array<i64: 9, 4, 4>}, {pipeline_mode = #tpu.pipeline_mode<synchronous>, transform_indices = @transform_3, window_bounds = array<i64: 1, 4>}, {pipeline_mode = #tpu.pipeline_mode<synchronous>, transform_indices = @transform_4, window_bounds = array<i64: 1, 4>}, {pipeline_mode = #tpu.pipeline_mode<synchronous>, transform_indices = @transform_5, window_bounds = array<i64: 1, 4>}, {transform_indices = @transform_6, window_bounds = array<i64: 1, 8, 8, 4>}, {transform_indices = @transform_7, window_bounds = array<i64: 1, 8, 8, 4>}]} {
    %c0 = arith.constant 0 : index
    %c0_0 = arith.constant 0 : index
    %c0_1 = arith.constant 0 : index
    %c0_2 = arith.constant 0 : index
    %c0_3 = arith.constant 0 : index
    %0 = vector.load %arg2[%c0, %c0_0, %c0_1, %c0_2, %c0_3] : memref<1x4x8x9x4xf32, #tpu.memory_space<vmem>>, vector<1x4x8x9x4xf32>
    %1 = vector.shape_cast %0 : vector<1x4x8x9x4xf32> to vector<4x8x9x4xf32>
    %c0_4 = arith.constant 0 : index
    %c0_5 = arith.constant 0 : index
    %c0_6 = arith.constant 0 : index
    %c0_7 = arith.constant 0 : index
    %c0_8 = arith.constant 0 : index
    %2 = vector.load %arg3[%c0_4, %c0_5, %c0_6, %c0_7, %c0_8] : memref<1x1x2x9x4xf32, #tpu.memory_space<vmem>>, vector<1x1x2x9x4xf32>
    %3 = vector.shape_cast %2 : vector<1x1x2x9x4xf32> to vector<2x9x4xf32>
    %c0_9 = arith.constant 0 : index
    %c0_10 = arith.constant 0 : index
    %c0_11 = arith.constant 0 : index
    %4 = vector.load %arg4[%c0_9, %c0_10, %c0_11] : memref<9x4x4xf32, #tpu.memory_space<vmem>>, vector<9x4x4xf32>
    %5 = vector.extract_strided_slice %1 {offsets = [0, 0, 0, 0], sizes = [1, 8, 9, 4], strides = [1, 1, 1, 1]} : vector<4x8x9x4xf32> to vector<1x8x9x4xf32>
    %6 = vector.shape_cast %5 : vector<1x8x9x4xf32> to vector<8x9x4xf32>
    %7 = vector.extract_strided_slice %1 {offsets = [1, 0, 0, 0], sizes = [1, 8, 9, 4], strides = [1, 1, 1, 1]} : vector<4x8x9x4xf32> to vector<1x8x9x4xf32>
    %8 = vector.shape_cast %7 : vector<1x8x9x4xf32> to vector<8x9x4xf32>
    %9 = vector.extract_strided_slice %1 {offsets = [2, 0, 0, 0], sizes = [1, 8, 9, 4], strides = [1, 1, 1, 1]} : vector<4x8x9x4xf32> to vector<1x8x9x4xf32>
    %10 = vector.shape_cast %9 : vector<1x8x9x4xf32> to vector<8x9x4xf32>
    %11 = vector.extract_strided_slice %1 {offsets = [3, 0, 0, 0], sizes = [1, 8, 9, 4], strides = [1, 1, 1, 1]} : vector<4x8x9x4xf32> to vector<1x8x9x4xf32>
    %12 = vector.shape_cast %11 : vector<1x8x9x4xf32> to vector<8x9x4xf32>
    %13 = vector.extract_strided_slice %6 {offsets = [1, 0, 0], sizes = [7, 9, 4], strides = [1, 1, 1]} : vector<8x9x4xf32> to vector<7x9x4xf32>
    %14 = vector.extract_strided_slice %3 {offsets = [0, 0, 0], sizes = [1, 9, 4], strides = [1, 1, 1]} : vector<2x9x4xf32> to vector<1x9x4xf32>
    %15 = tpu.concatenate %13, %14 in 0 : vector<7x9x4xf32>, vector<1x9x4xf32> -> vector<8x9x4xf32>
    %16 = vector.extract_strided_slice %8 {offsets = [1, 0, 0], sizes = [7, 9, 4], strides = [1, 1, 1]} : vector<8x9x4xf32> to vector<7x9x4xf32>
    %17 = vector.extract_strided_slice %3 {offsets = [1, 0, 0], sizes = [1, 9, 4], strides = [1, 1, 1]} : vector<2x9x4xf32> to vector<1x9x4xf32>
    %18 = tpu.concatenate %16, %17 in 0 : vector<7x9x4xf32>, vector<1x9x4xf32> -> vector<8x9x4xf32>
    %c8_i32 = arith.constant 8 : i32
    %19 = arith.muli %arg1, %c8_i32 : i32
    %20 = tpu.iota {dimensions = array<i32: 0>} : vector<8x8x1xi32>
    %21 = vector.broadcast %19 : i32 to vector<8x8x1xi32>
    %22 = arith.addi %21, %20 : vector<8x8x1xi32>
    %23 = tpu.iota {dimensions = array<i32: 1>} : vector<8x8x1xi32>
    %c0_i32 = arith.constant 0 : i32
    %24 = vector.broadcast %c0_i32 : i32 to vector<8x8x1xi32>
    %25 = arith.cmpi eq, %22, %24 : vector<8x8x1xi32>
    %c0_i32_12 = arith.constant 0 : i32
    %26 = vector.broadcast %c0_i32_12 : i32 to vector<8x8x1xi32>
    %27 = arith.cmpi eq, %23, %26 : vector<8x8x1xi32>
    %cst = arith.constant 0.000000e+00 : f32
    %28 = vector.broadcast %cst : f32 to vector<64x4xf32>
    %29 = vector.extract_strided_slice %6 {offsets = [0, 0, 0], sizes = [8, 8, 4], strides = [1, 1, 1]} : vector<8x9x4xf32> to vector<8x8x4xf32>
    %30 = vector.shape_cast %29 : vector<8x8x4xf32> to vector<64x4xf32>
    %31 = vector.extract_strided_slice %4 {offsets = [0, 0, 0], sizes = [1, 4, 4], strides = [1, 1, 1]} : vector<9x4x4xf32> to vector<1x4x4xf32>
    %32 = vector.shape_cast %31 : vector<1x4x4xf32> to vector<4x4xf32>
    %cst_13 = arith.constant dense<0.000000e+00> : vector<64x4xf32>
    %33 = tpu.matmul %30, %32, %cst_13 {dimension_numbers = #tpu.dot_dimension_numbers<[1], [0], [0], [1], [0, 0, 1, 1], [], []>} : vector<64x4xf32>, vector<4x4xf32>, vector<64x4xf32> -> vector<64x4xf32>
    %34 = arith.addf %28, %33 : vector<64x4xf32>
    %cst_14 = arith.constant -1.000000e+30 : f32
    %35 = vector.shape_cast %25 : vector<8x8x1xi1> to vector<8x8x1xi1>
    %36 = vector.broadcast %35 : vector<8x8x1xi1> to vector<8x8x4xi1>
    %37 = vector.broadcast %cst_14 : f32 to vector<8x8x4xf32>
    %38 = arith.select %36, %37, %29 : vector<8x8x4xi1>, vector<8x8x4xf32>
    %cst_15 = arith.constant -1.000000e+30 : f32
    %39 = vector.shape_cast %27 : vector<8x8x1xi1> to vector<8x8x1xi1>
    %40 = vector.broadcast %39 : vector<8x8x1xi1> to vector<8x8x4xi1>
    %41 = vector.broadcast %cst_15 : f32 to vector<8x8x4xf32>
    %42 = arith.select %40, %41, %38 : vector<8x8x4xi1>, vector<8x8x4xf32>
    %43 = vector.extract_strided_slice %8 {offsets = [0, 0, 0], sizes = [8, 8, 4], strides = [1, 1, 1]} : vector<8x9x4xf32> to vector<8x8x4xf32>
    %44 = vector.shape_cast %43 : vector<8x8x4xf32> to vector<64x4xf32>
    %45 = vector.extract_strided_slice %4 {offsets = [1, 0, 0], sizes = [1, 4, 4], strides = [1, 1, 1]} : vector<9x4x4xf32> to vector<1x4x4xf32>
    %46 = vector.shape_cast %45 : vector<1x4x4xf32> to vector<4x4xf32>
    %cst_16 = arith.constant dense<0.000000e+00> : vector<64x4xf32>
    %47 = tpu.matmul %44, %46, %cst_16 {dimension_numbers = #tpu.dot_dimension_numbers<[1], [0], [0], [1], [0, 0, 1, 1], [], []>} : vector<64x4xf32>, vector<4x4xf32>, vector<64x4xf32> -> vector<64x4xf32>
    %48 = arith.addf %34, %47 : vector<64x4xf32>
    %cst_17 = arith.constant -1.000000e+30 : f32
    %49 = vector.shape_cast %25 : vector<8x8x1xi1> to vector<8x8x1xi1>
    %50 = vector.broadcast %49 : vector<8x8x1xi1> to vector<8x8x4xi1>
    %51 = vector.broadcast %cst_17 : f32 to vector<8x8x4xf32>
    %52 = arith.select %50, %51, %43 : vector<8x8x4xi1>, vector<8x8x4xf32>
    %53 = arith.maximumf %42, %52 : vector<8x8x4xf32>
    %54 = vector.extract_strided_slice %6 {offsets = [0, 1, 0], sizes = [8, 8, 4], strides = [1, 1, 1]} : vector<8x9x4xf32> to vector<8x8x4xf32>
    %55 = vector.shape_cast %54 : vector<8x8x4xf32> to vector<64x4xf32>
    %56 = vector.extract_strided_slice %4 {offsets = [2, 0, 0], sizes = [1, 4, 4], strides = [1, 1, 1]} : vector<9x4x4xf32> to vector<1x4x4xf32>
    %57 = vector.shape_cast %56 : vector<1x4x4xf32> to vector<4x4xf32>
    %cst_18 = arith.constant dense<0.000000e+00> : vector<64x4xf32>
    %58 = tpu.matmul %55, %57, %cst_18 {dimension_numbers = #tpu.dot_dimension_numbers<[1], [0], [0], [1], [0, 0, 1, 1], [], []>} : vector<64x4xf32>, vector<4x4xf32>, vector<64x4xf32> -> vector<64x4xf32>
    %59 = arith.addf %48, %58 : vector<64x4xf32>
    %cst_19 = arith.constant -1.000000e+30 : f32
    %60 = vector.shape_cast %25 : vector<8x8x1xi1> to vector<8x8x1xi1>
    %61 = vector.broadcast %60 : vector<8x8x1xi1> to vector<8x8x4xi1>
    %62 = vector.broadcast %cst_19 : f32 to vector<8x8x4xf32>
    %63 = arith.select %61, %62, %54 : vector<8x8x4xi1>, vector<8x8x4xf32>
    %64 = arith.maximumf %53, %63 : vector<8x8x4xf32>
    %65 = vector.extract_strided_slice %10 {offsets = [0, 0, 0], sizes = [8, 8, 4], strides = [1, 1, 1]} : vector<8x9x4xf32> to vector<8x8x4xf32>
    %66 = vector.shape_cast %65 : vector<8x8x4xf32> to vector<64x4xf32>
    %67 = vector.extract_strided_slice %4 {offsets = [3, 0, 0], sizes = [1, 4, 4], strides = [1, 1, 1]} : vector<9x4x4xf32> to vector<1x4x4xf32>
    %68 = vector.shape_cast %67 : vector<1x4x4xf32> to vector<4x4xf32>
    %cst_20 = arith.constant dense<0.000000e+00> : vector<64x4xf32>
    %69 = tpu.matmul %66, %68, %cst_20 {dimension_numbers = #tpu.dot_dimension_numbers<[1], [0], [0], [1], [0, 0, 1, 1], [], []>} : vector<64x4xf32>, vector<4x4xf32>, vector<64x4xf32> -> vector<64x4xf32>
    %70 = arith.addf %59, %69 : vector<64x4xf32>
    %cst_21 = arith.constant -1.000000e+30 : f32
    %71 = vector.shape_cast %27 : vector<8x8x1xi1> to vector<8x8x1xi1>
    %72 = vector.broadcast %71 : vector<8x8x1xi1> to vector<8x8x4xi1>
    %73 = vector.broadcast %cst_21 : f32 to vector<8x8x4xf32>
    %74 = arith.select %72, %73, %65 : vector<8x8x4xi1>, vector<8x8x4xf32>
    %75 = arith.maximumf %64, %74 : vector<8x8x4xf32>
    %76 = vector.extract_strided_slice %12 {offsets = [0, 0, 0], sizes = [8, 8, 4], strides = [1, 1, 1]} : vector<8x9x4xf32> to vector<8x8x4xf32>
    %77 = vector.shape_cast %76 : vector<8x8x4xf32> to vector<64x4xf32>
    %78 = vector.extract_strided_slice %4 {offsets = [4, 0, 0], sizes = [1, 4, 4], strides = [1, 1, 1]} : vector<9x4x4xf32> to vector<1x4x4xf32>
    %79 = vector.shape_cast %78 : vector<1x4x4xf32> to vector<4x4xf32>
    %cst_22 = arith.constant dense<0.000000e+00> : vector<64x4xf32>
    %80 = tpu.matmul %77, %79, %cst_22 {dimension_numbers = #tpu.dot_dimension_numbers<[1], [0], [0], [1], [0, 0, 1, 1], [], []>} : vector<64x4xf32>, vector<4x4xf32>, vector<64x4xf32> -> vector<64x4xf32>
    %81 = arith.addf %70, %80 : vector<64x4xf32>
    %82 = arith.maximumf %75, %76 : vector<8x8x4xf32>
    %83 = vector.extract_strided_slice %10 {offsets = [0, 1, 0], sizes = [8, 8, 4], strides = [1, 1, 1]} : vector<8x9x4xf32> to vector<8x8x4xf32>
    %84 = vector.shape_cast %83 : vector<8x8x4xf32> to vector<64x4xf32>
    %85 = vector.extract_strided_slice %4 {offsets = [5, 0, 0], sizes = [1, 4, 4], strides = [1, 1, 1]} : vector<9x4x4xf32> to vector<1x4x4xf32>
    %86 = vector.shape_cast %85 : vector<1x4x4xf32> to vector<4x4xf32>
    %cst_23 = arith.constant dense<0.000000e+00> : vector<64x4xf32>
    %87 = tpu.matmul %84, %86, %cst_23 {dimension_numbers = #tpu.dot_dimension_numbers<[1], [0], [0], [1], [0, 0, 1, 1], [], []>} : vector<64x4xf32>, vector<4x4xf32>, vector<64x4xf32> -> vector<64x4xf32>
    %88 = arith.addf %81, %87 : vector<64x4xf32>
    %89 = arith.maximumf %82, %83 : vector<8x8x4xf32>
    %90 = vector.extract_strided_slice %15 {offsets = [0, 0, 0], sizes = [8, 8, 4], strides = [1, 1, 1]} : vector<8x9x4xf32> to vector<8x8x4xf32>
    %91 = vector.shape_cast %90 : vector<8x8x4xf32> to vector<64x4xf32>
    %92 = vector.extract_strided_slice %4 {offsets = [6, 0, 0], sizes = [1, 4, 4], strides = [1, 1, 1]} : vector<9x4x4xf32> to vector<1x4x4xf32>
    %93 = vector.shape_cast %92 : vector<1x4x4xf32> to vector<4x4xf32>
    %cst_24 = arith.constant dense<0.000000e+00> : vector<64x4xf32>
    %94 = tpu.matmul %91, %93, %cst_24 {dimension_numbers = #tpu.dot_dimension_numbers<[1], [0], [0], [1], [0, 0, 1, 1], [], []>} : vector<64x4xf32>, vector<4x4xf32>, vector<64x4xf32> -> vector<64x4xf32>
    %95 = arith.addf %88, %94 : vector<64x4xf32>
    %cst_25 = arith.constant -1.000000e+30 : f32
    %96 = vector.shape_cast %27 : vector<8x8x1xi1> to vector<8x8x1xi1>
    %97 = vector.broadcast %96 : vector<8x8x1xi1> to vector<8x8x4xi1>
    %98 = vector.broadcast %cst_25 : f32 to vector<8x8x4xf32>
    %99 = arith.select %97, %98, %90 : vector<8x8x4xi1>, vector<8x8x4xf32>
    %100 = arith.maximumf %89, %99 : vector<8x8x4xf32>
    %101 = vector.extract_strided_slice %18 {offsets = [0, 0, 0], sizes = [8, 8, 4], strides = [1, 1, 1]} : vector<8x9x4xf32> to vector<8x8x4xf32>
    %102 = vector.shape_cast %101 : vector<8x8x4xf32> to vector<64x4xf32>
    %103 = vector.extract_strided_slice %4 {offsets = [7, 0, 0], sizes = [1, 4, 4], strides = [1, 1, 1]} : vector<9x4x4xf32> to vector<1x4x4xf32>
    %104 = vector.shape_cast %103 : vector<1x4x4xf32> to vector<4x4xf32>
    %cst_26 = arith.constant dense<0.000000e+00> : vector<64x4xf32>
    %105 = tpu.matmul %102, %104, %cst_26 {dimension_numbers = #tpu.dot_dimension_numbers<[1], [0], [0], [1], [0, 0, 1, 1], [], []>} : vector<64x4xf32>, vector<4x4xf32>, vector<64x4xf32> -> vector<64x4xf32>
    %106 = arith.addf %95, %105 : vector<64x4xf32>
    %107 = arith.maximumf %100, %101 : vector<8x8x4xf32>
    %108 = vector.extract_strided_slice %15 {offsets = [0, 1, 0], sizes = [8, 8, 4], strides = [1, 1, 1]} : vector<8x9x4xf32> to vector<8x8x4xf32>
    %109 = vector.shape_cast %108 : vector<8x8x4xf32> to vector<64x4xf32>
    %110 = vector.extract_strided_slice %4 {offsets = [8, 0, 0], sizes = [1, 4, 4], strides = [1, 1, 1]} : vector<9x4x4xf32> to vector<1x4x4xf32>
    %111 = vector.shape_cast %110 : vector<1x4x4xf32> to vector<4x4xf32>
    %cst_27 = arith.constant dense<0.000000e+00> : vector<64x4xf32>
    %112 = tpu.matmul %109, %111, %cst_27 {dimension_numbers = #tpu.dot_dimension_numbers<[1], [0], [0], [1], [0, 0, 1, 1], [], []>} : vector<64x4xf32>, vector<4x4xf32>, vector<64x4xf32> -> vector<64x4xf32>
    %113 = arith.addf %106, %112 : vector<64x4xf32>
    %114 = arith.maximumf %107, %108 : vector<8x8x4xf32>
    %c0_28 = arith.constant 0 : index
    %c0_29 = arith.constant 0 : index
    %115 = vector.load %arg6[%c0_28, %c0_29] : memref<1x4xf32, #tpu.memory_space<vmem>>, vector<1x4xf32>
    %116 = vector.shape_cast %115 : vector<1x4xf32> to vector<1x1x4xf32>
    %117 = vector.broadcast %116 : vector<1x1x4xf32> to vector<8x8x4xf32>
    %118 = arith.mulf %114, %117 : vector<8x8x4xf32>
    %c0_30 = arith.constant 0 : index
    %c0_31 = arith.constant 0 : index
    %119 = vector.load %arg7[%c0_30, %c0_31] : memref<1x4xf32, #tpu.memory_space<vmem>>, vector<1x4xf32>
    %120 = vector.shape_cast %119 : vector<1x4xf32> to vector<1x1x4xf32>
    %121 = vector.broadcast %120 : vector<1x1x4xf32> to vector<8x8x4xf32>
    %122 = arith.addf %118, %121 : vector<8x8x4xf32>
    %cst_32 = arith.constant 0.000000e+00 : f32
    %123 = vector.broadcast %cst_32 : f32 to vector<8x8x4xf32>
    %124 = arith.maximumf %122, %123 : vector<8x8x4xf32>
    %c0_33 = arith.constant 0 : index
    %c0_34 = arith.constant 0 : index
    %c0_35 = arith.constant 0 : index
    %c0_36 = arith.constant 0 : index
    %125 = vector.load %arg8[%c0_33, %c0_34, %c0_35, %c0_36] : memref<1x8x8x4xf32, #tpu.memory_space<vmem>>, vector<1x8x8x4xf32>
    %126 = vector.shape_cast %125 : vector<1x8x8x4xf32> to vector<8x8x4xf32>
    %127 = vector.shape_cast %124 : vector<8x8x4xf32> to vector<1x8x8x4xf32>
    tpu.vector_store %arg8[%c0_33, %c0_34, %c0_35, %c0_36], %127 {strides = array<i32>} : memref<1x8x8x4xf32, #tpu.memory_space<vmem>>, vector<1x8x8x4xf32>,
    %128 = vector.shape_cast %113 : vector<64x4xf32> to vector<8x8x4xf32>
    %c0_37 = arith.constant 0 : index
    %c0_38 = arith.constant 0 : index
    %129 = vector.load %arg5[%c0_37, %c0_38] : memref<1x4xf32, #tpu.memory_space<vmem>>, vector<1x4xf32>
    %130 = vector.shape_cast %129 : vector<1x4xf32> to vector<1x1x4xf32>
    %131 = vector.broadcast %130 : vector<1x1x4xf32> to vector<8x8x4xf32>
    %132 = arith.addf %128, %131 : vector<8x8x4xf32>
    %cst_39 = arith.constant 0.000000e+00 : f32
    %133 = vector.broadcast %cst_39 : f32 to vector<8x8x4xf32>
    %134 = arith.maximumf %132, %133 : vector<8x8x4xf32>
    %c0_40 = arith.constant 0 : index
    %c0_41 = arith.constant 0 : index
    %c0_42 = arith.constant 0 : index
    %c0_43 = arith.constant 0 : index
    %135 = vector.load %arg9[%c0_40, %c0_41, %c0_42, %c0_43] : memref<1x8x8x4xf32, #tpu.memory_space<vmem>>, vector<1x8x8x4xf32>
    %136 = vector.shape_cast %135 : vector<1x8x8x4xf32> to vector<8x8x4xf32>
    %137 = vector.shape_cast %134 : vector<8x8x4xf32> to vector<1x8x8x4xf32>
    tpu.vector_store %arg9[%c0_40, %c0_41, %c0_42, %c0_43], %137 {strides = array<i32>} : memref<1x8x8x4xf32, #tpu.memory_space<vmem>>, vector<1x8x8x4xf32>,
    return
  }
  func.func @transform_0(%arg0: i32, %arg1: i32) -> (i32, i32, i32, i32, i32) {
    %c0_i32 = arith.constant 0 : i32
    %c0_i32_0 = arith.constant 0 : i32
    %c0_i32_1 = arith.constant 0 : i32
    %c0_i32_2 = arith.constant 0 : i32
    return %arg0, %c0_i32, %arg1, %c0_i32_0, %c0_i32_1 : i32, i32, i32, i32, i32
  }
  func.func @transform_1(%arg0: i32, %arg1: i32) -> (i32, i32, i32, i32, i32) {
    %c0_i32 = arith.constant 0 : i32
    %c0_i32_0 = arith.constant 0 : i32
    %c0_i32_1 = arith.constant 0 : i32
    %c0_i32_2 = arith.constant 0 : i32
    return %arg0, %arg1, %c0_i32, %c0_i32_0, %c0_i32_1 : i32, i32, i32, i32, i32
  }
  func.func @transform_2(%arg0: i32, %arg1: i32) -> (i32, i32, i32) {
    %c0_i32 = arith.constant 0 : i32
    %c0_i32_0 = arith.constant 0 : i32
    %c0_i32_1 = arith.constant 0 : i32
    %c0_i32_2 = arith.constant 0 : i32
    return %c0_i32, %c0_i32_0, %c0_i32_1 : i32, i32, i32
  }
  func.func @transform_3(%arg0: i32, %arg1: i32) -> (i32, i32) {
    %c0_i32 = arith.constant 0 : i32
    %c0_i32_0 = arith.constant 0 : i32
    %c0_i32_1 = arith.constant 0 : i32
    return %c0_i32, %c0_i32_0 : i32, i32
  }
  func.func @transform_4(%arg0: i32, %arg1: i32) -> (i32, i32) {
    %c0_i32 = arith.constant 0 : i32
    %c0_i32_0 = arith.constant 0 : i32
    %c0_i32_1 = arith.constant 0 : i32
    return %c0_i32, %c0_i32_0 : i32, i32
  }
  func.func @transform_5(%arg0: i32, %arg1: i32) -> (i32, i32) {
    %c0_i32 = arith.constant 0 : i32
    %c0_i32_0 = arith.constant 0 : i32
    %c0_i32_1 = arith.constant 0 : i32
    return %c0_i32, %c0_i32_0 : i32, i32
  }
  func.func @transform_6(%arg0: i32, %arg1: i32) -> (i32, i32, i32, i32) {
    %c0_i32 = arith.constant 0 : i32
    %c0_i32_0 = arith.constant 0 : i32
    %c0_i32_1 = arith.constant 0 : i32
    return %arg0, %arg1, %c0_i32, %c0_i32_0 : i32, i32, i32, i32
  }
  func.func @transform_7(%arg0: i32, %arg1: i32) -> (i32, i32, i32, i32) {
    %c0_i32 = arith.constant 0 : i32
    %c0_i32_0 = arith.constant 0 : i32
    %c0_i32_1 = arith.constant 0 : i32
    return %arg0, %arg1, %c0_i32, %c0_i32_0 : i32, i32, i32, i32
  }
}

</mosaic_0001>

<llo_original>
// kernel: _lambda_.1
$region0: #{_lambda_.1}
  #allocation0 [shape = 'u32[]', space=smem, size = 0x4, offset = 0x4, fixed_abs, tag = 'smem constant byte address 0x4 - core index']
  #allocation1 [shape = 'u32[144,128]{1,0:T(1,128)}', space=vmem, size = 0x12000, scoped, tag = 'internal scratch']
  %s0 = inlined_call_operand.vmem [shape: f32[2,4,9,9,4], index: 0, kind: input, shape index: {}]
  %s1 = inlined_call_operand.vmem [shape: f32[2,1,2,9,4], index: 1, kind: input, shape index: {}]
  %s2 = inlined_call_operand.vmem [shape: f32[9,4,4], index: 2, kind: input, shape index: {}]
  %s3 = inlined_call_operand.vmem [shape: f32[1,4], index: 3, kind: input, shape index: {}]
  %s4 = inlined_call_operand.vmem [shape: f32[1,4], index: 4, kind: input, shape index: {}]
  %s5 = inlined_call_operand.vmem [shape: f32[1,4], index: 5, kind: input, shape index: {}]
  %s6 = inlined_call_operand.vmem [shape: f32[2,8,8,4], index: 6, kind: output, shape index: {0}]
  %s7 = inlined_call_operand.vmem [shape: f32[2,8,8,4], index: 7, kind: output, shape index: {1}]
  %8 = xla_tuple %s6, %s7
  %s9 = sld [smem:[#allocation0]]
  $region117: #{_lambda_.1} parent=0
    _
  %s11 = ssub.s32 1, %s9
  %s12 = scalar_select 0, %s11, %s9
  $region1: #{_lambda_.1} parent=0
    #allocation2 [shape = 'u8[524288]{0}', space=vmem, size = 0x80000, scoped, tag = 'input window, operand 0']
    loop: start=0, step=1, limit=4
    $region2: #{_lambda_.1} parent=1 // loop_pre_header
      _
    $region3: #{_lambda_.1} parent=1 // loop_header
      %s14 = sphi 0, %s18
      %p15 = scmp.ge.s32.totalorder %s14, 4
      %s21 = sphi 0, %s33
      %s22 = sphi 0, %s29
      %s23 = sphi 0, %s21
      %s24 = sphi 0, %s22
      %s25 = sphi 0, %s23
      %s26 = sphi 0, %s24
      %s38 = sphi 0, %s40
      %s41 = sphi 0, %s38
      %s42 = sphi 0, %s41
      %s58 = sphi 0, %s42
      %s66 = sphi 0, %s68
      %s69 = sphi 0, %s66
      %s70 = sphi 0, %s69
      %s86 = sphi 0, %s70
      %s90 = sphi 0, %s90
      %s92 = sphi 0, %s90
      %s93 = sphi 0, %s92
      %s107 = sphi 0, %s93
      %s111 = sphi 0, %s111
      %s113 = sphi 0, %s111
      %s114 = sphi 0, %s113
      %s128 = sphi 0, %s114
      %s132 = sphi 0, %s132
      %s134 = sphi 0, %s132
      %s135 = sphi 0, %s134
      %s149 = sphi 0, %s135
      %s153 = sphi 0, %s153
      %s155 = sphi 0, %s153
      %s156 = sphi 0, %s155
      %s170 = sphi 0, %s156
      %s178 = sphi 0, %s180
      %s181 = sphi 0, %s178
      %s182 = sphi 0, %s181
      %s198 = sphi 0, %s182
      %s206 = sphi 0, %s208
      %s209 = sphi 0, %s206
      %s210 = sphi 0, %s209
      %s226 = sphi 0, %s210
    $region4: #{_lambda_.1} parent=1 // loop_header_branch
      %17 = sbr.rel (%p15) target = $region8
    $region5: #{_lambda_.1} parent=1 // loop_body
      %s19 = ssub.s32 %s14, 1
      %s20 = ssub.s32 %s14, 2
      %s27 = sadd.s32 1, %s22
      %p28 = scmp.ge.s32.totalorder %s27, 1
      %s29 = scalar_select %p28, 0, %s27
      %s30 = sadd.s32 1, %s21
      %s31 = scalar_select %p28, %s30, %s21
      %p32 = scmp.ge.s32.totalorder %s31, 2
      %s33 = scalar_select %p32, 0, %s31
      %s34 = ssub.s32 %s21, %s33
      %s35 = ssub.s32 %s22, %s29
      %s36 = sor.u32 %s34, %s35
      %p37 = scmp.eq.s32.totalorder %s36, 0
      %s39 = sadd.s32 %s38, 1
      %s40 = scalar_select %p37, %s38, %s39
      %p43 = pneg %p37
      %p44 = scmp.eq.s32.totalorder %s14, 1
      %p45 = por %p43, %p44
      %p46 = scmp.ne.s32.totalorder %s38, %s41
      %p47 = scmp.eq.s32.totalorder %s14, 0
      %p48 = por %p46, %p47
      %p49 = scmp.ne.s32.totalorder %s38, %s41
      %p50 = scmp.eq.s32.totalorder %s19, 1
      %p51 = por %p49, %p50
      %p52 = scmp.ne.s32.totalorder %s41, %s42
      %p53 = scmp.eq.s32.totalorder %s19, 0
      %p54 = por %p52, %p53
      %p55 = scmp.ne.s32.totalorder %s41, %s42
      %p56 = scmp.eq.s32.totalorder %s20, 1
      %p57 = por %p55, %p56
      %p59 = scmp.ne.s32.totalorder %s42, %s58
      %p60 = scmp.eq.s32.totalorder %s20, 0
      %p61 = por %p59, %p60
      %s62 = ssub.s32 %s21, %s33
      %s63 = ssub.s32 %s22, %s29
      %s64 = sor.u32 %s62, %s63
      %p65 = scmp.eq.s32.totalorder %s64, 0
      %s67 = sadd.s32 %s66, 1
      %s68 = scalar_select %p65, %s66, %s67
      %p71 = pneg %p65
      %p72 = scmp.eq.s32.totalorder %s14, 1
      %p73 = por %p71, %p72
      %p74 = scmp.ne.s32.totalorder %s66, %s69
      %p75 = scmp.eq.s32.totalorder %s14, 0
      %p76 = por %p74, %p75
      %p77 = scmp.ne.s32.totalorder %s66, %s69
      %p78 = scmp.eq.s32.totalorder %s19, 1
      %p79 = por %p77, %p78
      %p80 = scmp.ne.s32.totalorder %s69, %s70
      %p81 = scmp.eq.s32.totalorder %s19, 0
      %p82 = por %p80, %p81
      %p83 = scmp.ne.s32.totalorder %s69, %s70
      %p84 = scmp.eq.s32.totalorder %s20, 1
      %p85 = por %p83, %p84
      %p87 = scmp.ne.s32.totalorder %s70, %s86
      %p88 = scmp.eq.s32.totalorder %s20, 0
      %p89 = por %p87, %p88
      %s91 = sadd.s32 %s90, 1
      %p94 = scmp.eq.s32.totalorder %s14, 1
      %p95 = scmp.ne.s32.totalorder %s90, %s92
      %p96 = scmp.eq.s32.totalorder %s14, 0
      %p97 = por %p95, %p96
      %p98 = scmp.ne.s32.totalorder %s90, %s92
      %p99 = scmp.eq.s32.totalorder %s19, 1
      %p100 = por %p98, %p99
      %p101 = scmp.ne.s32.totalorder %s92, %s93
      %p102 = scmp.eq.s32.totalorder %s19, 0
      %p103 = por %p101, %p102
      %p104 = scmp.ne.s32.totalorder %s92, %s93
      %p105 = scmp.eq.s32.totalorder %s20, 1
      %p106 = por %p104, %p105
      %p108 = scmp.ne.s32.totalorder %s93, %s107
      %p109 = scmp.eq.s32.totalorder %s20, 0
      %p110 = por %p108, %p109
      %s112 = sadd.s32 %s111, 1
      %p115 = scmp.eq.s32.totalorder %s14, 1
      %p116 = scmp.ne.s32.totalorder %s111, %s113
      %p117 = scmp.eq.s32.totalorder %s14, 0
      %p118 = por %p116, %p117
      %p119 = scmp.ne.s32.totalorder %s111, %s113
      %p120 = scmp.eq.s32.totalorder %s19, 1
      %p121 = por %p119, %p120
      %p122 = scmp.ne.s32.totalorder %s113, %s114
      %p123 = scmp.eq.s32.totalorder %s19, 0
      %p124 = por %p122, %p123
      %p125 = scmp.ne.s32.totalorder %s113, %s114
      %p126 = scmp.eq.s32.totalorder %s20, 1
      %p127 = por %p125, %p126
      %p129 = scmp.ne.s32.totalorder %s114, %s128
      %p130 = scmp.eq.s32.totalorder %s20, 0
      %p131 = por %p129, %p130
      %s133 = sadd.s32 %s132, 1
      %p136 = scmp.eq.s32.totalorder %s14, 1
      %p137 = scmp.ne.s32.totalorder %s132, %s134
      %p138 = scmp.eq.s32.totalorder %s14, 0
      %p139 = por %p137, %p138
      %p140 = scmp.ne.s32.totalorder %s132, %s134
      %p141 = scmp.eq.s32.totalorder %s19, 1
      %p142 = por %p140, %p141
      %p143 = scmp.ne.s32.totalorder %s134, %s135
      %p144 = scmp.eq.s32.totalorder %s19, 0
      %p145 = por %p143, %p144
      %p146 = scmp.ne.s32.totalorder %s134, %s135
      %p147 = scmp.eq.s32.totalorder %s20, 1
      %p148 = por %p146, %p147
      %p150 = scmp.ne.s32.totalorder %s135, %s149
      %p151 = scmp.eq.s32.totalorder %s20, 0
      %p152 = por %p150, %p151
      %s154 = sadd.s32 %s153, 1
      %p157 = scmp.eq.s32.totalorder %s14, 1
      %p158 = scmp.ne.s32.totalorder %s153, %s155
      %p159 = scmp.eq.s32.totalorder %s14, 0
      %p160 = por %p158, %p159
      %p161 = scmp.ne.s32.totalorder %s153, %s155
      %p162 = scmp.eq.s32.totalorder %s19, 1
      %p163 = por %p161, %p162
      %p164 = scmp.ne.s32.totalorder %s155, %s156
      %p165 = scmp.eq.s32.totalorder %s19, 0
      %p166 = por %p164, %p165
      %p167 = scmp.ne.s32.totalorder %s155, %s156
      %p168 = scmp.eq.s32.totalorder %s20, 1
      %p169 = por %p167, %p168
      %p171 = scmp.ne.s32.totalorder %s156, %s170
      %p172 = scmp.eq.s32.totalorder %s20, 0
      %p173 = por %p171, %p172
      %s174 = ssub.s32 %s21, %s33
      %s175 = ssub.s32 %s22, %s29
      %s176 = sor.u32 %s174, %s175
      %p177 = scmp.eq.s32.totalorder %s176, 0
      %s179 = sadd.s32 %s178, 1
      %s180 = scalar_select %p177, %s178, %s179
      %p183 = pneg %p177
      %p184 = scmp.eq.s32.totalorder %s14, 1
      %p185 = por %p183, %p184
      %p186 = scmp.ne.s32.totalorder %s178, %s181
      %p187 = scmp.eq.s32.totalorder %s14, 0
      %p188 = por %p186, %p187
      %p189 = scmp.ne.s32.totalorder %s178, %s181
      %p190 = scmp.eq.s32.totalorder %s19, 1
      %p191 = por %p189, %p190
      %p192 = scmp.ne.s32.totalorder %s181, %s182
      %p193 = scmp.eq.s32.totalorder %s19, 0
      %p194 = por %p192, %p193
      %p195 = scmp.ne.s32.totalorder %s181, %s182
      %p196 = scmp.eq.s32.totalorder %s20, 1
      %p197 = por %p195, %p196
      %p199 = scmp.ne.s32.totalorder %s182, %s198
      %p200 = scmp.eq.s32.totalorder %s20, 0
      %p201 = por %p199, %p200
      %s202 = ssub.s32 %s21, %s33
      %s203 = ssub.s32 %s22, %s29
      %s204 = sor.u32 %s202, %s203
      %p205 = scmp.eq.s32.totalorder %s204, 0
      %s207 = sadd.s32 %s206, 1
      %s208 = scalar_select %p205, %s206, %s207
      %p211 = pneg %p205
      %p212 = scmp.eq.s32.totalorder %s14, 1
      %p213 = por %p211, %p212
      %p214 = scmp.ne.s32.totalorder %s206, %s209
      %p215 = scmp.eq.s32.totalorder %s14, 0
      %p216 = por %p214, %p215
      %p217 = scmp.ne.s32.totalorder %s206, %s209
      %p218 = scmp.eq.s32.totalorder %s19, 1
      %p219 = por %p217, %p218
      %p220 = scmp.ne.s32.totalorder %s209, %s210
      %p221 = scmp.eq.s32.totalorder %s19, 0
      %p222 = por %p220, %p221
      %p223 = scmp.ne.s32.totalorder %s209, %s210
      %p224 = scmp.eq.s32.totalorder %s20, 1
      %p225 = por %p223, %p224
      %p227 = scmp.ne.s32.totalorder %s210, %s226
      %p228 = scmp.eq.s32.totalorder %s20, 0
      %p229 = por %p227, %p228
      %p230 = scmp.le.s32.totalorder 1, %s14
      %p231 = scmp.lt.s32.totalorder %s14, 3
      %p232 = pnand %p230, %p231
      %p233 = pneg %p232
      // Predicated region
      $region9: #{_lambda_.1} parent=5 // pred_check
        _
      $region10: #{_lambda_.1} parent=5 // pred_check_branch
        %235 = sbr.rel (%p232) target = $region12
      $region11: #{_lambda_.1} parent=5 // pred_region
        %s236 = ssub.s32 %s14, 1
        // Predicated region
        $region13: #{_lambda_.1} parent=11 // pred_check
          %p237 = pneg %p103
        $region14: #{_lambda_.1} parent=11 // pred_check_branch
          %239 = sbr.rel (%p237) target = $region16
        $region15: #{_lambda_.1} parent=11 // pred_region
          _
        $region16: #{_lambda_.1} parent=11 // pred_fallthru
          _
        // Predicated region
        $region17: #{_lambda_.1} parent=11 // pred_check
          %p240 = pneg %p124
        $region18: #{_lambda_.1} parent=11 // pred_check_branch
          %242 = sbr.rel (%p240) target = $region20
        $region19: #{_lambda_.1} parent=11 // pred_region
          _
        $region20: #{_lambda_.1} parent=11 // pred_fallthru
          _
        // Predicated region
        $region21: #{_lambda_.1} parent=11 // pred_check
          %p243 = pneg %p145
        $region22: #{_lambda_.1} parent=11 // pred_check_branch
          %245 = sbr.rel (%p243) target = $region24
        $region23: #{_lambda_.1} parent=11 // pred_region
          _
        $region24: #{_lambda_.1} parent=11 // pred_fallthru
          _
        // Predicated region
        $region25: #{_lambda_.1} parent=11 // pred_check
          %p246 = pneg %p166
        $region26: #{_lambda_.1} parent=11 // pred_check_branch
          %248 = sbr.rel (%p246) target = $region28
        $region27: #{_lambda_.1} parent=11 // pred_region
          _
        $region28: #{_lambda_.1} parent=11 // pred_fallthru
          _
      $region12: #{_lambda_.1} parent=5 // pred_fallthru
        _
      %p249 = scmp.lt.s32.totalorder %s14, 2
      // Predicated region
      $region29: #{_lambda_.1} parent=5 // pred_check
        %p250 = pneg %p249
      $region30: #{_lambda_.1} parent=5 // pred_check_branch
        %252 = sbr.rel (%p250) target = $region32
      $region31: #{_lambda_.1} parent=5 // pred_region
        // Predicated region
        $region33: #{_lambda_.1} parent=31 // pred_check
          %p253 = pneg %p48
        $region34: #{_lambda_.1} parent=31 // pred_check_branch
          %255 = sbr.rel (%p253) target = $region36
        $region35: #{_lambda_.1} parent=31 // pred_region
          %s256 = sand.u32 %s38, 1
          %s257 = sand.u32 %s38, 1
          %s258 = smul.addr %s257, 512
          %s259 = scalar_lea.vmem [#allocation2], %s258
          %s260 = smul.u32 8, %s22
          %s261 = ssub.s32 9, %s260
          %p262 = scmp.lt.s32.totalorder %s261, 8
          %s263 = scalar_select %p262, %s261, 8
          %s264 = smul.u32 512, %s263
          %s265 = smul.u32 %s264, 2
          %p266 = scmp.ne.s32.totalorder 0, %s265
          %s267 = smul.addr %s260, 2
          %s268 = smul.addr %s21, 72
          %s269 = sadd.s32 %s267, %s268
          %s270 = smul.addr %s269, 8
          %s271 = scalar_lea.vmem %s0, %s270
          %s272 = smul.u32 %s263, 2
          // Predicated region
          $region37: #{_lambda_.1} parent=35 // pred_check
            %p273 = pneg %p266
          $region38: #{_lambda_.1} parent=35 // pred_check_branch
            %275 = sbr.rel (%p273) target = $region40
          $region39: #{_lambda_.1} parent=35 // pred_region
            // Predicated region
            $region41: #{_lambda_.1} parent=39 // pred_check
              _
            $region42: #{_lambda_.1} parent=39 // pred_check_branch
              %277 = sbr.rel (0) target = $region44
            $region43: #{_lambda_.1} parent=39 // pred_region
              // Predicated region
              $region63: #{_lambda_.1} parent=43 // pred_check
                _
              $region64: #{_lambda_.1} parent=43 // pred_check_branch
                %458 = sbr.rel (0) target = $region66
              $region65: #{_lambda_.1} parent=43 // pred_region
                %s459 = sshrl.u32 %s272, 4
                // While loop
                $region67: #{_lambda_.1} parent=65 // loop_pre_header
                  _
                $region68: #{_lambda_.1} parent=65 // loop_header
                  %s461 = sphi 0, %s463
                  %p462 = scmp.ge.s32.totalorder %s461, %s459
                  %s466 = sphi 0, %s599
                  %s467 = sphi %s271, %s602
                  %s468 = sphi %s259, %s603
                $region69: #{_lambda_.1} parent=65 // loop_header_branch
                  %465 = sbr.rel (%p462) target = $region73
                $region70: #{_lambda_.1} parent=65 // loop_body
                  %v469 = vld [vmem:[%s467] sm:$0xff]
                  %470 = vst [vmem:[%s468] sm:$0xff] %v469
                  %v471 = vld [vmem:[%s467 + $0x8] sm:$0xff]
                  %472 = vst [vmem:[%s468 + $0x8] sm:$0xff] %v471
                  %v473 = vld [vmem:[%s467 + $0x10] sm:$0xff]
                  %474 = vst [vmem:[%s468 + $0x10] sm:$0xff] %v473
                  %v475 = vld [vmem:[%s467 + $0x18] sm:$0xff]
                  %476 = vst [vmem:[%s468 + $0x18] sm:$0xff] %v475
                  %v477 = vld [vmem:[%s467 + $0x20] sm:$0xff]
                  %478 = vst [vmem:[%s468 + $0x20] sm:$0xff] %v477
                  %v479 = vld [vmem:[%s467 + $0x28] sm:$0xff]
                  %480 = vst [vmem:[%s468 + $0x28] sm:$0xff] %v479
                  %v481 = vld [vmem:[%s467 + $0x30] sm:$0xff]
                  %482 = vst [vmem:[%s468 + $0x30] sm:$0xff] %v481
                  %v483 = vld [vmem:[%s467 + $0x38] sm:$0xff]
                  %484 = vst [vmem:[%s468 + $0x38] sm:$0xff] %v483
                  %v485 = vld [vmem:[%s467 + $0x40] sm:$0xff]
                  %486 = vst [vmem:[%s468 + $0x40] sm:$0xff] %v485
                  %v487 = vld [vmem:[%s467 + $0x48] sm:$0xff]
                  %488 = vst [vmem:[%s468 + $0x48] sm:$0xff] %v487
                  %v489 = vld [vmem:[%s467 + $0x50] sm:$0xff]
                  %490 = vst [vmem:[%s468 + $0x50] sm:$0xff] %v489
                  %v491 = vld [vmem:[%s467 + $0x58] sm:$0xff]
                  %492 = vst [vmem:[%s468 + $0x58] sm:$0xff] %v491
                  %v493 = vld [vmem:[%s467 + $0x60] sm:$0xff]
                  %494 = vst [vmem:[%s468 + $0x60] sm:$0xff] %v493
                  %v495 = vld [vmem:[%s467 + $0x68] sm:$0xff]
                  %496 = vst [vmem:[%s468 + $0x68] sm:$0xff] %v495
                  %v497 = vld [vmem:[%s467 + $0x70] sm:$0xff]
                  %498 = vst [vmem:[%s468 + $0x70] sm:$0xff] %v497
                  %v499 = vld [vmem:[%s467 + $0x78] sm:$0xff]
                  %500 = vst [vmem:[%s468 + $0x78] sm:$0xff] %v499
                  %v501 = vld [vmem:[%s467 + $0x90] sm:$0xff]
                  %502 = vst [vmem:[%s468 + $0x80] sm:$0xff] %v501
                  %v503 = vld [vmem:[%s467 + $0x98] sm:$0xff]
                  %504 = vst [vmem:[%s468 + $0x88] sm:$0xff] %v503
                  %v505 = vld [vmem:[%s467 + $0xa0] sm:$0xff]
                  %506 = vst [vmem:[%s468 + $0x90] sm:$0xff] %v505
                  %v507 = vld [vmem:[%s467 + $0xa8] sm:$0xff]
                  %508 = vst [vmem:[%s468 + $0x98] sm:$0xff] %v507
                  %v509 = vld [vmem:[%s467 + $0xb0] sm:$0xff]
                  %510 = vst [vmem:[%s468 + $0xa0] sm:$0xff] %v509
                  %v511 = vld [vmem:[%s467 + $0xb8] sm:$0xff]
                  %512 = vst [vmem:[%s468 + $0xa8] sm:$0xff] %v511
                  %v513 = vld [vmem:[%s467 + $0xc0] sm:$0xff]
                  %514 = vst [vmem:[%s468 + $0xb0] sm:$0xff] %v513
                  %v515 = vld [vmem:[%s467 + $0xc8] sm:$0xff]
                  %516 = vst [vmem:[%s468 + $0xb8] sm:$0xff] %v515
                  %v517 = vld [vmem:[%s467 + $0xd0] sm:$0xff]
                  %518 = vst [vmem:[%s468 + $0xc0] sm:$0xff] %v517
                  %v519 = vld [vmem:[%s467 + $0xd8] sm:$0xff]
                  %520 = vst [vmem:[%s468 + $0xc8] sm:$0xff] %v519
                  %v521 = vld [vmem:[%s467 + $0xe0] sm:$0xff]
                  %522 = vst [vmem:[%s468 + $0xd0] sm:$0xff] %v521
                  %v523 = vld [vmem:[%s467 + $0xe8] sm:$0xff]
                  %524 = vst [vmem:[%s468 + $0xd8] sm:$0xff] %v523
                  %v525 = vld [vmem:[%s467 + $0xf0] sm:$0xff]
                  %526 = vst [vmem:[%s468 + $0xe0] sm:$0xff] %v525
                  %v527 = vld [vmem:[%s467 + $0xf8] sm:$0xff]
                  %528 = vst [vmem:[%s468 + $0xe8] sm:$0xff] %v527
                  %v529 = vld [vmem:[%s467 + $0x100] sm:$0xff]
                  %530 = vst [vmem:[%s468 + $0xf0] sm:$0xff] %v529
                  %v531 = vld [vmem:[%s467 + $0x108] sm:$0xff]
                  %532 = vst [vmem:[%s468 + $0xf8] sm:$0xff] %v531
                  %v533 = vld [vmem:[%s467 + $0x120] sm:$0xff]
                  %534 = vst [vmem:[%s468 + $0x100] sm:$0xff] %v533
                  %v535 = vld [vmem:[%s467 + $0x128] sm:$0xff]
                  %536 = vst [vmem:[%s468 + $0x108] sm:$0xff] %v535
                  %v537 = vld [vmem:[%s467 + $0x130] sm:$0xff]
                  %538 = vst [vmem:[%s468 + $0x110] sm:$0xff] %v537
                  %v539 = vld [vmem:[%s467 + $0x138] sm:$0xff]
                  %540 = vst [vmem:[%s468 + $0x118] sm:$0xff] %v539
                  %v541 = vld [vmem:[%s467 + $0x140] sm:$0xff]
                  %542 = vst [vmem:[%s468 + $0x120] sm:$0xff] %v541
                  %v543 = vld [vmem:[%s467 + $0x148] sm:$0xff]
                  %544 = vst [vmem:[%s468 + $0x128] sm:$0xff] %v543
                  %v545 = vld [vmem:[%s467 + $0x150] sm:$0xff]
                  %546 = vst [vmem:[%s468 + $0x130] sm:$0xff] %v545
                  %v547 = vld [vmem:[%s467 + $0x158] sm:$0xff]
                  %548 = vst [vmem:[%s468 + $0x138] sm:$0xff] %v547
                  %v549 = vld [vmem:[%s467 + $0x160] sm:$0xff]
                  %550 = vst [vmem:[%s468 + $0x140] sm:$0xff] %v549
                  %v551 = vld [vmem:[%s467 + $0x168] sm:$0xff]
                  %552 = vst [vmem:[%s468 + $0x148] sm:$0xff] %v551
                  %v553 = vld [vmem:[%s467 + $0x170] sm:$0xff]
                  %554 = vst [vmem:[%s468 + $0x150] sm:$0xff] %v553
                  %v555 = vld [vmem:[%s467 + $0x178] sm:$0xff]
                  %556 = vst [vmem:[%s468 + $0x158] sm:$0xff] %v555
                  %v557 = vld [vmem:[%s467 + $0x180] sm:$0xff]
                  %558 = vst [vmem:[%s468 + $0x160] sm:$0xff] %v557
                  %v559 = vld [vmem:[%s467 + $0x188] sm:$0xff]
                  %560 = vst [vmem:[%s468 + $0x168] sm:$0xff] %v559
                  %v561 = vld [vmem:[%s467 + $0x190] sm:$0xff]
                  %562 = vst [vmem:[%s468 + $0x170] sm:$0xff] %v561
                  %v563 = vld [vmem:[%s467 + $0x198] sm:$0xff]
                  %564 = vst [vmem:[%s468 + $0x178] sm:$0xff] %v563
                  %v565 = vld [vmem:[%s467 + $0x1b0] sm:$0xff]
                  %566 = vst [vmem:[%s468 + $0x180] sm:$0xff] %v565
                  %v567 = vld [vmem:[%s467 + $0x1b8] sm:$0xff]
                  %568 = vst [vmem:[%s468 + $0x188] sm:$0xff] %v567
                  %v569 = vld [vmem:[%s467 + $0x1c0] sm:$0xff]
                  %570 = vst [vmem:[%s468 + $0x190] sm:$0xff] %v569
                  %v571 = vld [vmem:[%s467 + $0x1c8] sm:$0xff]
                  %572 = vst [vmem:[%s468 + $0x198] sm:$0xff] %v571
                  %v573 = vld [vmem:[%s467 + $0x1d0] sm:$0xff]
                  %574 = vst [vmem:[%s468 + $0x1a0] sm:$0xff] %v573
                  %v575 = vld [vmem:[%s467 + $0x1d8] sm:$0xff]
                  %576 = vst [vmem:[%s468 + $0x1a8] sm:$0xff] %v575
                  %v577 = vld [vmem:[%s467 + $0x1e0] sm:$0xff]
                  %578 = vst [vmem:[%s468 + $0x1b0] sm:$0xff] %v577
                  %v579 = vld [vmem:[%s467 + $0x1e8] sm:$0xff]
                  %580 = vst [vmem:[%s468 + $0x1b8] sm:$0xff] %v579
                  %v581 = vld [vmem:[%s467 + $0x1f0] sm:$0xff]
                  %582 = vst [vmem:[%s468 + $0x1c0] sm:$0xff] %v581
                  %v583 = vld [vmem:[%s467 + $0x1f8] sm:$0xff]
                  %584 = vst [vmem:[%s468 + $0x1c8] sm:$0xff] %v583
                  %v585 = vld [vmem:[%s467 + $0x200] sm:$0xff]
                  %586 = vst [vmem:[%s468 + $0x1d0] sm:$0xff] %v585
                  %v587 = vld [vmem:[%s467 + $0x208] sm:$0xff]
                  %588 = vst [vmem:[%s468 + $0x1d8] sm:$0xff] %v587
                  %v589 = vld [vmem:[%s467 + $0x210] sm:$0xff]
                  %590 = vst [vmem:[%s468 + $0x1e0] sm:$0xff] %v589
                  %v591 = vld [vmem:[%s467 + $0x218] sm:$0xff]
                  %592 = vst [vmem:[%s468 + $0x1e8] sm:$0xff] %v591
                  %v593 = vld [vmem:[%s467 + $0x220] sm:$0xff]
                  %594 = vst [vmem:[%s468 + $0x1f0] sm:$0xff] %v593
                  %v595 = vld [vmem:[%s467 + $0x228] sm:$0xff]
                  %596 = vst [vmem:[%s468 + $0x1f8] sm:$0xff] %v595
                  %s597 = sadd.s32 1, %s466
                  %p598 = scmp.ge.s32.totalorder %s597, %s459
                  %s599 = scalar_select %p598, 0, %s597
                  %s600 = smul.u32 %s599, 128
                  %s601 = smul.u32 %s599, 128
                  %s602 = scalar_lea.vmem %s271, %s600
                  %s603 = scalar_lea.vmem %s259, %s601 [#allocation2]
                $region71: #{_lambda_.1} parent=65 // loop_footer
                  %s463 = sadd.s32 %s461, 1
                $region72: #{_lambda_.1} parent=65 // loop_footer_branch
                  %460 = sbr.rel target = $region68
                $region73: #{_lambda_.1} parent=65 // loop_exit
                  _
                %s604 = sshrl.u32 %s272, 4
                %s605 = sand.u32 %s272, 15
                %s606 = smul.u32 %s604, 16
                %s607 = smul.u32 8, %s606
                %s608 = scalar_lea.vmem %s271, %s607
                %s609 = smul.u32 8, %s606
                %s610 = scalar_lea.vmem %s259, %s609 [#allocation2]
                // While loop
                $region74: #{_lambda_.1} parent=65 // loop_pre_header
                  _
                $region75: #{_lambda_.1} parent=65 // loop_header
                  %s612 = sphi 0, %s614
                  %p613 = scmp.ge.s32.totalorder %s612, %s605
                  %s617 = sphi 0, %s630
                  %s618 = sphi %s608, %s633
                  %s619 = sphi %s610, %s634
                $region76: #{_lambda_.1} parent=65 // loop_header_branch
                  %616 = sbr.rel (%p613) target = $region80
                $region77: #{_lambda_.1} parent=65 // loop_body
                  %v620 = vld [vmem:[%s618] sm:$0xff]
                  %621 = vst [vmem:[%s619] sm:$0xff] %v620
                  %v622 = vld [vmem:[%s618 + $0x90] sm:$0xff]
                  %623 = vst [vmem:[%s619 + $0x80] sm:$0xff] %v622
                  %v624 = vld [vmem:[%s618 + $0x120] sm:$0xff]
                  %625 = vst [vmem:[%s619 + $0x100] sm:$0xff] %v624
                  %v626 = vld [vmem:[%s618 + $0x1b0] sm:$0xff]
                  %627 = vst [vmem:[%s619 + $0x180] sm:$0xff] %v626
                  %s628 = sadd.s32 1, %s617
                  %p629 = scmp.ge.s32.totalorder %s628, %s605
                  %s630 = scalar_select %p629, 0, %s628
                  %s631 = smul.u32 %s630, 8
                  %s632 = smul.u32 %s630, 8
                  %s633 = scalar_lea.vmem %s608, %s631
                  %s634 = scalar_lea.vmem %s610, %s632 [#allocation2]
                $region78: #{_lambda_.1} parent=65 // loop_footer
                  %s614 = sadd.s32 %s612, 1
                $region79: #{_lambda_.1} parent=65 // loop_footer_branch
                  %611 = sbr.rel target = $region75
                $region80: #{_lambda_.1} parent=65 // loop_exit
                  _
              $region66: #{_lambda_.1} parent=43 // pred_fallthru
                _
              // Predicated region
              $region81: #{_lambda_.1} parent=43 // pred_check
                _
              $region82: #{_lambda_.1} parent=43 // pred_check_branch
                %636 = sbr.rel target = $region84
              $region83: #{_lambda_.1} parent=43 // pred_region
                _
              $region84: #{_lambda_.1} parent=43 // pred_fallthru
                _
            $region44: #{_lambda_.1} parent=39 // pred_fallthru
              _
            // Predicated region
            $region45: #{_lambda_.1} parent=39 // pred_check
              _
            $region46: #{_lambda_.1} parent=39 // pred_check_branch
              %279 = sbr.rel target = $region48
            $region47: #{_lambda_.1} parent=39 // pred_region
              %s281 = sshrl.u32 %s272, 4
              // While loop
              $region49: #{_lambda_.1} parent=47 // loop_pre_header
                _
              $region50: #{_lambda_.1} parent=47 // loop_header
                %s283 = sphi 0, %s285
                %p284 = scmp.ge.s32.totalorder %s283, %s281
                %s288 = sphi 0, %s421
                %s289 = sphi %s271, %s424
                %s290 = sphi %s259, %s425
              $region51: #{_lambda_.1} parent=47 // loop_header_branch
                %287 = sbr.rel (%p284) target = $region55
              $region52: #{_lambda_.1} parent=47 // loop_body
                %v291 = vld [vmem:[%s289] sm:$0xff]
                %292 = vst [vmem:[%s290] sm:$0xff] %v291
                %v293 = vld [vmem:[%s289 + $0x8] sm:$0xff]
                %294 = vst [vmem:[%s290 + $0x8] sm:$0xff] %v293
                %v295 = vld [vmem:[%s289 + $0x10] sm:$0xff]
                %296 = vst [vmem:[%s290 + $0x10] sm:$0xff] %v295
                %v297 = vld [vmem:[%s289 + $0x18] sm:$0xff]
                %298 = vst [vmem:[%s290 + $0x18] sm:$0xff] %v297
                %v299 = vld [vmem:[%s289 + $0x20] sm:$0xff]
                %300 = vst [vmem:[%s290 + $0x20] sm:$0xff] %v299
                %v301 = vld [vmem:[%s289 + $0x28] sm:$0xff]
                %302 = vst [vmem:[%s290 + $0x28] sm:$0xff] %v301
                %v303 = vld [vmem:[%s289 + $0x30] sm:$0xff]
                %304 = vst [vmem:[%s290 + $0x30] sm:$0xff] %v303
                %v305 = vld [vmem:[%s289 + $0x38] sm:$0xff]
                %306 = vst [vmem:[%s290 + $0x38] sm:$0xff] %v305
                %v307 = vld [vmem:[%s289 + $0x40] sm:$0xff]
                %308 = vst [vmem:[%s290 + $0x40] sm:$0xff] %v307
                %v309 = vld [vmem:[%s289 + $0x48] sm:$0xff]
                %310 = vst [vmem:[%s290 + $0x48] sm:$0xff] %v309
                %v311 = vld [vmem:[%s289 + $0x50] sm:$0xff]
                %312 = vst [vmem:[%s290 + $0x50] sm:$0xff] %v311
                %v313 = vld [vmem:[%s289 + $0x58] sm:$0xff]
                %314 = vst [vmem:[%s290 + $0x58] sm:$0xff] %v313
                %v315 = vld [vmem:[%s289 + $0x60] sm:$0xff]
                %316 = vst [vmem:[%s290 + $0x60] sm:$0xff] %v315
                %v317 = vld [vmem:[%s289 + $0x68] sm:$0xff]
                %318 = vst [vmem:[%s290 + $0x68] sm:$0xff] %v317
                %v319 = vld [vmem:[%s289 + $0x70] sm:$0xff]
                %320 = vst [vmem:[%s290 + $0x70] sm:$0xff] %v319
                %v321 = vld [vmem:[%s289 + $0x78] sm:$0xff]
                %322 = vst [vmem:[%s290 + $0x78] sm:$0xff] %v321
                %v323 = vld [vmem:[%s289 + $0x90] sm:$0xff]
                %324 = vst [vmem:[%s290 + $0x80] sm:$0xff] %v323
                %v325 = vld [vmem:[%s289 + $0x98] sm:$0xff]
                %326 = vst [vmem:[%s290 + $0x88] sm:$0xff] %v325
                %v327 = vld [vmem:[%s289 + $0xa0] sm:$0xff]
                %328 = vst [vmem:[%s290 + $0x90] sm:$0xff] %v327
                %v329 = vld [vmem:[%s289 + $0xa8] sm:$0xff]
                %330 = vst [vmem:[%s290 + $0x98] sm:$0xff] %v329
                %v331 = vld [vmem:[%s289 + $0xb0] sm:$0xff]
                %332 = vst [vmem:[%s290 + $0xa0] sm:$0xff] %v331
                %v333 = vld [vmem:[%s289 + $0xb8] sm:$0xff]
                %334 = vst [vmem:[%s290 + $0xa8] sm:$0xff] %v333
                %v335 = vld [vmem:[%s289 + $0xc0] sm:$0xff]
                %336 = vst [vmem:[%s290 + $0xb0] sm:$0xff] %v335
                %v337 = vld [vmem:[%s289 + $0xc8] sm:$0xff]
                %338 = vst [vmem:[%s290 + $0xb8] sm:$0xff] %v337
                %v339 = vld [vmem:[%s289 + $0xd0] sm:$0xff]
                %340 = vst [vmem:[%s290 + $0xc0] sm:$0xff] %v339
                %v341 = vld [vmem:[%s289 + $0xd8] sm:$0xff]
                %342 = vst [vmem:[%s290 + $0xc8] sm:$0xff] %v341
                %v343 = vld [vmem:[%s289 + $0xe0] sm:$0xff]
                %344 = vst [vmem:[%s290 + $0xd0] sm:$0xff] %v343
                %v345 = vld [vmem:[%s289 + $0xe8] sm:$0xff]
                %346 = vst [vmem:[%s290 + $0xd8] sm:$0xff] %v345
                %v347 = vld [vmem:[%s289 + $0xf0] sm:$0xff]
                %348 = vst [vmem:[%s290 + $0xe0] sm:$0xff] %v347
                %v349 = vld [vmem:[%s289 + $0xf8] sm:$0xff]
                %350 = vst [vmem:[%s290 + $0xe8] sm:$0xff] %v349
                %v351 = vld [vmem:[%s289 + $0x100] sm:$0xff]
                %352 = vst [vmem:[%s290 + $0xf0] sm:$0xff] %v351
                %v353 = vld [vmem:[%s289 + $0x108] sm:$0xff]
                %354 = vst [vmem:[%s290 + $0xf8] sm:$0xff] %v353
                %v355 = vld [vmem:[%s289 + $0x120] sm:$0xff]
                %356 = vst [vmem:[%s290 + $0x100] sm:$0xff] %v355
                %v357 = vld [vmem:[%s289 + $0x128] sm:$0xff]
                %358 = vst [vmem:[%s290 + $0x108] sm:$0xff] %v357
                %v359 = vld [vmem:[%s289 + $0x130] sm:$0xff]
                %360 = vst [vmem:[%s290 + $0x110] sm:$0xff] %v359
                %v361 = vld [vmem:[%s289 + $0x138] sm:$0xff]
                %362 = vst [vmem:[%s290 + $0x118] sm:$0xff] %v361
                %v363 = vld [vmem:[%s289 + $0x140] sm:$0xff]
                %364 = vst [vmem:[%s290 + $0x120] sm:$0xff] %v363
                %v365 = vld [vmem:[%s289 + $0x148] sm:$0xff]
                %366 = vst [vmem:[%s290 + $0x128] sm:$0xff] %v365
                %v367 = vld [vmem:[%s289 + $0x150] sm:$0xff]
                %368 = vst [vmem:[%s290 + $0x130] sm:$0xff] %v367
                %v369 = vld [vmem:[%s289 + $0x158] sm:$0xff]
                %370 = vst [vmem:[%s290 + $0x138] sm:$0xff] %v369
                %v371 = vld [vmem:[%s289 + $0x160] sm:$0xff]
                %372 = vst [vmem:[%s290 + $0x140] sm:$0xff] %v371
                %v373 = vld [vmem:[%s289 + $0x168] sm:$0xff]
                %374 = vst [vmem:[%s290 + $0x148] sm:$0xff] %v373
                %v375 = vld [vmem:[%s289 + $0x170] sm:$0xff]
                %376 = vst [vmem:[%s290 + $0x150] sm:$0xff] %v375
                %v377 = vld [vmem:[%s289 + $0x178] sm:$0xff]
                %378 = vst [vmem:[%s290 + $0x158] sm:$0xff] %v377
                %v379 = vld [vmem:[%s289 + $0x180] sm:$0xff]
                %380 = vst [vmem:[%s290 + $0x160] sm:$0xff] %v379
                %v381 = vld [vmem:[%s289 + $0x188] sm:$0xff]
                %382 = vst [vmem:[%s290 + $0x168] sm:$0xff] %v381
                %v383 = vld [vmem:[%s289 + $0x190] sm:$0xff]
                %384 = vst [vmem:[%s290 + $0x170] sm:$0xff] %v383
                %v385 = vld [vmem:[%s289 + $0x198] sm:$0xff]
                %386 = vst [vmem:[%s290 + $0x178] sm:$0xff] %v385
                %v387 = vld [vmem:[%s289 + $0x1b0] sm:$0xff]
                %388 = vst [vmem:[%s290 + $0x180] sm:$0xff] %v387
                %v389 = vld [vmem:[%s289 + $0x1b8] sm:$0xff]
                %390 = vst [vmem:[%s290 + $0x188] sm:$0xff] %v389
                %v391 = vld [vmem:[%s289 + $0x1c0] sm:$0xff]
                %392 = vst [vmem:[%s290 + $0x190] sm:$0xff] %v391
                %v393 = vld [vmem:[%s289 + $0x1c8] sm:$0xff]
                %394 = vst [vmem:[%s290 + $0x198] sm:$0xff] %v393
                %v395 = vld [vmem:[%s289 + $0x1d0] sm:$0xff]
                %396 = vst [vmem:[%s290 + $0x1a0] sm:$0xff] %v395
                %v397 = vld [vmem:[%s289 + $0x1d8] sm:$0xff]
                %398 = vst [vmem:[%s290 + $0x1a8] sm:$0xff] %v397
                %v399 = vld [vmem:[%s289 + $0x1e0] sm:$0xff]
                %400 = vst [vmem:[%s290 + $0x1b0] sm:$0xff] %v399
                %v401 = vld [vmem:[%s289 + $0x1e8] sm:$0xff]
                %402 = vst [vmem:[%s290 + $0x1b8] sm:$0xff] %v401
                %v403 = vld [vmem:[%s289 + $0x1f0] sm:$0xff]
                %404 = vst [vmem:[%s290 + $0x1c0] sm:$0xff] %v403
                %v405 = vld [vmem:[%s289 + $0x1f8] sm:$0xff]
                %406 = vst [vmem:[%s290 + $0x1c8] sm:$0xff] %v405
                %v407 = vld [vmem:[%s289 + $0x200] sm:$0xff]
                %408 = vst [vmem:[%s290 + $0x1d0] sm:$0xff] %v407
                %v409 = vld [vmem:[%s289 + $0x208] sm:$0xff]
                %410 = vst [vmem:[%s290 + $0x1d8] sm:$0xff] %v409
                %v411 = vld [vmem:[%s289 + $0x210] sm:$0xff]
                %412 = vst [vmem:[%s290 + $0x1e0] sm:$0xff] %v411
                %v413 = vld [vmem:[%s289 + $0x218] sm:$0xff]
                %414 = vst [vmem:[%s290 + $0x1e8] sm:$0xff] %v413
                %v415 = vld [vmem:[%s289 + $0x220] sm:$0xff]
                %416 = vst [vmem:[%s290 + $0x1f0] sm:$0xff] %v415
                %v417 = vld [vmem:[%s289 + $0x228] sm:$0xff]
                %418 = vst [vmem:[%s290 + $0x1f8] sm:$0xff] %v417
                %s419 = sadd.s32 1, %s288
                %p420 = scmp.ge.s32.totalorder %s419, %s281
                %s421 = scalar_select %p420, 0, %s419
                %s422 = smul.u32 %s421, 128
                %s423 = smul.u32 %s421, 128
                %s424 = scalar_lea.vmem %s271, %s422
                %s425 = scalar_lea.vmem %s259, %s423 [#allocation2]
              $region53: #{_lambda_.1} parent=47 // loop_footer
                %s285 = sadd.s32 %s283, 1
              $region54: #{_lambda_.1} parent=47 // loop_footer_branch
                %282 = sbr.rel target = $region50
              $region55: #{_lambda_.1} parent=47 // loop_exit
                _
              %s426 = sshrl.u32 %s272, 4
              %s427 = sand.u32 %s272, 15
              %s428 = smul.u32 %s426, 16
              %s429 = smul.u32 8, %s428
              %s430 = scalar_lea.vmem %s271, %s429
              %s431 = smul.u32 8, %s428
              %s432 = scalar_lea.vmem %s259, %s431 [#allocation2]
              // While loop
              $region56: #{_lambda_.1} parent=47 // loop_pre_header
                _
              $region57: #{_lambda_.1} parent=47 // loop_header
                %s434 = sphi 0, %s436
                %p435 = scmp.ge.s32.totalorder %s434, %s427
                %s439 = sphi 0, %s452
                %s440 = sphi %s430, %s455
                %s441 = sphi %s432, %s456
              $region58: #{_lambda_.1} parent=47 // loop_header_branch
                %438 = sbr.rel (%p435) target = $region62
              $region59: #{_lambda_.1} parent=47 // loop_body
                %v442 = vld [vmem:[%s440] sm:$0xff]
                %443 = vst [vmem:[%s441] sm:$0xff] %v442
                %v444 = vld [vmem:[%s440 + $0x90] sm:$0xff]
                %445 = vst [vmem:[%s441 + $0x80] sm:$0xff] %v444
                %v446 = vld [vmem:[%s440 + $0x120] sm:$0xff]
                %447 = vst [vmem:[%s441 + $0x100] sm:$0xff] %v446
                %v448 = vld [vmem:[%s440 + $0x1b0] sm:$0xff]
                %449 = vst [vmem:[%s441 + $0x180] sm:$0xff] %v448
                %s450 = sadd.s32 1, %s439
                %p451 = scmp.ge.s32.totalorder %s450, %s427
                %s452 = scalar_select %p451, 0, %s450
                %s453 = smul.u32 %s452, 8
                %s454 = smul.u32 %s452, 8
                %s455 = scalar_lea.vmem %s430, %s453
                %s456 = scalar_lea.vmem %s432, %s454 [#allocation2]
              $region60: #{_lambda_.1} parent=47 // loop_footer
                %s436 = sadd.s32 %s434, 1
              $region61: #{_lambda_.1} parent=47 // loop_footer_branch
                %433 = sbr.rel target = $region57
              $region62: #{_lambda_.1} parent=47 // loop_exit
                _
            $region48: #{_lambda_.1} parent=39 // pred_fallthru
              _
          $region40: #{_lambda_.1} parent=35 // pred_fallthru
            _
          %637 = vnop
        $region36: #{_lambda_.1} parent=31 // pred_fallthru
          _
        // Predicated region
        $region85: #{_lambda_.1} parent=31 // pred_check
          %p638 = pneg %p76
        $region86: #{_lambda_.1} parent=31 // pred_check_branch
          %640 = sbr.rel (%p638) target = $region88
        $region87: #{_lambda_.1} parent=31 // pred_region
          %p641 = scmp.lt.s32.totalorder %s21, 1
          %s642 = scalar_select %p641, %s21, 1
          %p643 = scmp.lt.s32.totalorder %s22, 0
          %s644 = scalar_select %p643, %s22, 0
          %s645 = smul.addr %s644, 4
          %s646 = smul.addr %s642, 4
          %s647 = sadd.s32 %s645, %s646
          %s648 = smul.addr %s647, 8
          %s649 = scalar_lea.vmem %s1, %s648
        $region88: #{_lambda_.1} parent=31 // pred_fallthru
          _
      $region32: #{_lambda_.1} parent=5 // pred_fallthru
        _
      %p650 = scmp.le.s32.totalorder 1, %s14
      %p651 = scmp.lt.s32.totalorder %s14, 3
      %p652 = pnand %p650, %p651
      %p653 = pneg %p652
      // Predicated region
      $region89: #{_lambda_.1} parent=5 // pred_check
        _
      $region90: #{_lambda_.1} parent=5 // pred_check_branch
        %655 = sbr.rel (%p652) target = $region92
      $region91: #{_lambda_.1} parent=5 // pred_region
        %s656 = ssub.s32 %s14, 1
        %s657 = sand.u32 %s41, 1
        %s658 = sand.u32 %s41, 1
        %s659 = smul.addr %s658, 512
        %s660 = scalar_lea.vmem [#allocation2], %s659
        // Predicated region
        $region93: #{_lambda_.1} parent=91 // pred_check
          %p661 = pneg %p54
        $region94: #{_lambda_.1} parent=91 // pred_check_branch
          %663 = sbr.rel (%p661) target = $region96
        $region95: #{_lambda_.1} parent=91 // pred_region
          _
        $region96: #{_lambda_.1} parent=91 // pred_fallthru
          _
        %s664 = sand.u32 %s41, 1
        %s665 = sand.u32 %s41, 1
        %s666 = smul.addr %s665, 512
        %s667 = scalar_lea.vmem [#allocation2], %s666
        %p668 = pneg %p54
        %p669 = pneg %p51
        %p670 = scmp.lt.s32.totalorder %s23, 1
        %s671 = scalar_select %p670, %s23, 1
        %p672 = scmp.lt.s32.totalorder %s24, 0
        %s673 = scalar_select %p672, %s24, 0
        %s674 = smul.addr %s673, 4
        %s675 = smul.addr %s671, 4
        %s676 = sadd.s32 %s674, %s675
        %s677 = smul.addr %s676, 8
        %s678 = scalar_lea.vmem %s1, %s677
        %p679 = pneg %p82
        %p680 = pneg %p79
        %p681 = pneg %p103
        %p682 = pneg %p100
        %p683 = pneg %p124
        %p684 = pneg %p121
        %p685 = pneg %p145
        %p686 = pneg %p142
        %p687 = pneg %p166
        %p688 = pneg %p163
        %p689 = pneg %p194
        %p690 = pneg %p191
        %s691 = smul.u32 8, %s24
        %p692 = scmp.lt.s32.totalorder %s23, 1
        %s693 = scalar_select %p692, %s23, 1
        %p694 = scmp.lt.s32.totalorder %s691, 7
        %s695 = scalar_select %p694, %s691, 7
        %s696 = smul.addr %s693, 8
        %s697 = sadd.s32 %s695, %s696
        %s698 = smul.addr %s697, 8
        %s699 = scalar_lea.vmem %s6, %s698
        %p700 = pneg %p222
        %p701 = pneg %p219
        %s702 = smul.u32 8, %s24
        %p703 = scmp.lt.s32.totalorder %s23, 1
        %s704 = scalar_select %p703, %s23, 1
        %p705 = scmp.lt.s32.totalorder %s702, 7
        %s706 = scalar_select %p705, %s702, 7
        %s707 = smul.addr %s704, 8
        %s708 = sadd.s32 %s706, %s707
        %s709 = smul.addr %s708, 8
        %s710 = scalar_lea.vmem %s7, %s709
        %s711 = smul.u32 8, %s24
        %s712 = ssub.s32 9, %s711
        %p713 = scmp.lt.s32.totalorder %s712, 8
        %s714 = scalar_select %p713, %s712, 8
        %s715 = smul.u32 512, %s714
        %s716 = smul.u32 %s715, 2
        %p717 = scmp.lt.s32.totalorder %s23, 1
        %s718 = scalar_select %p717, %s23, 1
        %p719 = scmp.lt.s32.totalorder %s24, 0
        %s720 = scalar_select %p719, %s24, 0
        %s721 = smul.addr %s720, 4
        %s722 = smul.addr %s718, 4
        %s723 = sadd.s32 %s721, %s722
        %s724 = smul.addr %s723, 8
        %s725 = scalar_lea.vmem %s1, %s724
        %s726 = smul.u32 8, %s24
        %p727 = scmp.lt.s32.totalorder %s23, 1
        %s728 = scalar_select %p727, %s23, 1
        %p729 = scmp.lt.s32.totalorder %s726, 7
        %s730 = scalar_select %p729, %s726, 7
        %s731 = smul.addr %s728, 8
        %s732 = sadd.s32 %s730, %s731
        %s733 = smul.addr %s732, 8
        %s734 = scalar_lea.vmem %s6, %s733
        %s735 = smul.u32 8, %s24
        %s736 = smul.u32 8, %s24
        %p737 = scmp.lt.s32.totalorder %s23, 1
        %s738 = scalar_select %p737, %s23, 1
        %p739 = scmp.lt.s32.totalorder %s736, 7
        %s740 = scalar_select %p739, %s736, 7
        %s741 = smul.addr %s738, 8
        %s742 = sadd.s32 %s740, %s741
        %s743 = smul.addr %s742, 8
        %s744 = scalar_lea.vmem %s7, %s743
        %s745 = smul.u32 8, %s24
        %v746 = vld [vmem:[%s660] sm:$0xff]
        %v747 = vld [vmem:[%s660 + $0x8] sm:$0x1]
        %v748 = vld [vmem:[%s660 + $0x10] sm:$0xff]
        %v749 = vld [vmem:[%s660 + $0x18] sm:$0x1]
        %v750 = vld [vmem:[%s660 + $0x20] sm:$0xff]
        %v751 = vld [vmem:[%s660 + $0x28] sm:$0x1]
        %v752 = vld [vmem:[%s660 + $0x30] sm:$0xff]
        %v753 = vld [vmem:[%s660 + $0x38] sm:$0x1]
        %v754 = vld [vmem:[%s660 + $0x40] sm:$0xff]
        %v755 = vld [vmem:[%s660 + $0x48] sm:$0x1]
        %v756 = vld [vmem:[%s660 + $0x50] sm:$0xff]
        %v757 = vld [vmem:[%s660 + $0x58] sm:$0x1]
        %v758 = vld [vmem:[%s660 + $0x60] sm:$0xff]
        %v759 = vld [vmem:[%s660 + $0x68] sm:$0x1]
        %v760 = vld [vmem:[%s660 + $0x70] sm:$0xff]
        %v761 = vld [vmem:[%s660 + $0x78] sm:$0x1]
        %v762 = vld [vmem:[%s660 + $0x80] sm:$0xff]
        %v763 = vld [vmem:[%s660 + $0x90] sm:$0xff]
        %v764 = vld [vmem:[%s660 + $0xa0] sm:$0xff]
        %v765 = vld [vmem:[%s660 + $0xb0] sm:$0xff]
        %v766 = vld [vmem:[%s660 + $0xc0] sm:$0xff]
        %v767 = vld [vmem:[%s660 + $0xd0] sm:$0xff]
        %v768 = vld [vmem:[%s660 + $0xe0] sm:$0xff]
        %v769 = vld [vmem:[%s660 + $0xf0] sm:$0xff]
        %v770 = vld [vmem:[%s660 + $0x100] sm:$0xff]
        %v771 = vld [vmem:[%s660 + $0x108] sm:$0x1]
        %v772 = vld [vmem:[%s660 + $0x110] sm:$0xff]
        %v773 = vld [vmem:[%s660 + $0x118] sm:$0x1]
        %v774 = vld [vmem:[%s660 + $0x120] sm:$0xff]
        %v775 = vld [vmem:[%s660 + $0x128] sm:$0x1]
        %v776 = vld [vmem:[%s660 + $0x130] sm:$0xff]
        %v777 = vld [vmem:[%s660 + $0x138] sm:$0x1]
        %v778 = vld [vmem:[%s660 + $0x140] sm:$0xff]
        %v779 = vld [vmem:[%s660 + $0x148] sm:$0x1]
        %v780 = vld [vmem:[%s660 + $0x150] sm:$0xff]
        %v781 = vld [vmem:[%s660 + $0x158] sm:$0x1]
        %v782 = vld [vmem:[%s660 + $0x160] sm:$0xff]
        %v783 = vld [vmem:[%s660 + $0x168] sm:$0x1]
        %v784 = vld [vmem:[%s660 + $0x170] sm:$0xff]
        %v785 = vld [vmem:[%s660 + $0x178] sm:$0x1]
        %v786 = vld [vmem:[%s660 + $0x180] sm:$0xff]
        %v787 = vld [vmem:[%s660 + $0x190] sm:$0xff]
        %v788 = vld [vmem:[%s660 + $0x1a0] sm:$0xff]
        %v789 = vld [vmem:[%s660 + $0x1b0] sm:$0xff]
        %v790 = vld [vmem:[%s660 + $0x1c0] sm:$0xff]
        %v791 = vld [vmem:[%s660 + $0x1d0] sm:$0xff]
        %v792 = vld [vmem:[%s660 + $0x1e0] sm:$0xff]
        %v793 = vld [vmem:[%s660 + $0x1f0] sm:$0xff]
        %v794 = vld [vmem:[%s725] sm:$0xff]
        %v795 = vld [vmem:[%s725 + $0x8] sm:$0x1]
        %v796 = vld [vmem:[%s725 + $0x10] sm:$0xff]
        %v797 = vld [vmem:[%s2] sm:$0xf]
        %v798 = vld [vmem:[%s2 + $0x4] sm:$0xf]
        %v799 = vld [vmem:[%s2 + $0x8] sm:$0xf]
        %v800 = vld [vmem:[%s2 + $0xc] sm:$0xf]
        %v801 = vld [vmem:[%s2 + $0x10] sm:$0xf]
        %v802 = vld [vmem:[%s2 + $0x14] sm:$0xf]
        %v803 = vld [vmem:[%s2 + $0x18] sm:$0xf]
        %v804 = vld [vmem:[%s2 + $0x1c] sm:$0xf]
        %v805 = vld [vmem:[%s2 + $0x20] sm:$0xf]
        %s806 = smul.u32 %s24, 8
        %v807 = vstv %s806
        %v808 = vadd.s32 %v807, 1
        %v809 = vadd.s32 %v807, 2
        %v810 = vadd.s32 %v807, 3
        %v811 = vadd.s32 %v807, 4
        %v812 = vadd.s32 %v807, 5
        %v813 = vadd.s32 %v807, 6
        %v814 = vadd.s32 %v807, 7
        %v815 = vlaneseq
        %v816 = vshrl.u32 %v815, 7
        %vm817 = vcmp.eq.s32.totalorder %v807, 0
        %vm818 = vcmp.eq.s32.totalorder %v808, 0
        %vm819 = vcmp.eq.s32.totalorder %v809, 0
        %vm820 = vcmp.eq.s32.totalorder %v810, 0
        %vm821 = vcmp.eq.s32.totalorder %v811, 0
        %vm822 = vcmp.eq.s32.totalorder %v812, 0
        %vm823 = vcmp.eq.s32.totalorder %v813, 0
        %vm824 = vcmp.eq.s32.totalorder %v814, 0
        %vm825 = vcmp.eq.s32.totalorder %v816, 0
        %v826 = vsel %vm817, 1, 0
        %v827 = vsel %vm818, 1, 0
        %v828 = vsel %vm819, 1, 0
        %v829 = vsel %vm820, 1, 0
        %v830 = vsel %vm821, 1, 0
        %v831 = vsel %vm822, 1, 0
        %v832 = vsel %vm823, 1, 0
        %v833 = vsel %vm824, 1, 0
        %vm834 = vcmp.eq.s32.totalorder %v826, 1
        %vm835 = vcmp.eq.s32.totalorder %v827, 1
        %vm836 = vcmp.eq.s32.totalorder %v828, 1
        %vm837 = vcmp.eq.s32.totalorder %v829, 1
        %vm838 = vcmp.eq.s32.totalorder %v830, 1
        %vm839 = vcmp.eq.s32.totalorder %v831, 1
        %vm840 = vcmp.eq.s32.totalorder %v832, 1
        %vm841 = vcmp.eq.s32.totalorder %v833, 1
        %v842 = vsel %vm834, -1e+30, %v746
        %v843 = vsel %vm835, -1e+30, %v748
        %v844 = vsel %vm836, -1e+30, %v750
        %v845 = vsel %vm837, -1e+30, %v752
        %v846 = vsel %vm838, -1e+30, %v754
        %v847 = vsel %vm839, -1e+30, %v756
        %v848 = vsel %vm840, -1e+30, %v758
        %v849 = vsel %vm841, -1e+30, %v760
        %v850 = vsel %vm825, 1, 0
        %vm851 = vcmp.eq.s32.totalorder %v850, 1
        %v852 = vsel %vm851, -1e+30, %v842
        %v853 = vsel %vm851, -1e+30, %v843
        %v854 = vsel %vm851, -1e+30, %v844
        %v855 = vsel %vm851, -1e+30, %v845
        %v856 = vsel %vm851, -1e+30, %v846
        %v857 = vsel %vm851, -1e+30, %v847
        %v858 = vsel %vm851, -1e+30, %v848
        %v859 = vsel %vm851, -1e+30, %v849
        %vm860 = vcmask 31744
        %v862 = vsel %vm860, %v762, 0
        %v865 = vsel %vm860, %v763, 0
        %v868 = vsel %vm860, %v764, 0
        %v871 = vsel %vm860, %v765, 0
        %v874 = vsel %vm860, %v766, 0
        %v877 = vsel %vm860, %v767, 0
        %v880 = vsel %vm860, %v768, 0
        %v883 = vsel %vm860, %v769, 0
        %vm885 = vcmask 1043456
        %v887 = vsel %vm885, %v798, 0
        %889 = vmatprep.subr.mxu0 0.0
        %890 = vmatpush1.msra.mxu0 %v887
        %891 = vmatprep.subr.mxu0 0.0
        %892 = vmatpush1.msra.mxu0 0.0
        %893 = vmatprep.subr.mxu0 0.0
        %894 = vmatpush1.msra.mxu0 0.0
        %895 = vmatprep.subr.mxu0 0.0
        %896 = vmatpush1.msra.mxu0 0.0
        %897 = vmatprep.subr.mxu0 0.0
        %898 = vmatpush1.msra.mxu0 0.0
        %899 = vmatprep.subr.mxu0 0.0
        %900 = vmatpush1.msra.mxu0 0.0
        %901 = vmatprep.subr.mxu0 0.0
        %902 = vmatpush1.msra.mxu0 0.0
        %903 = vmatprep.subr.mxu0 0.0
        %904 = vmatpush1.msra.mxu0 0.0
        %905 = vmatprep.subr.mxu0 0.0
        %906 = vmatpush1.msra.mxu0 0.0
        %907 = vmatprep.subr.mxu0 0.0
        %908 = vmatpush1.msra.mxu0 0.0
        %909 = vmatprep.subr.mxu0 0.0
        %910 = vmatpush1.msra.mxu0 0.0
        %911 = vmatprep.subr.mxu0 0.0
        %912 = vmatpush1.msra.mxu0 0.0
        %913 = vmatprep.subr.mxu0 0.0
        %914 = vmatpush1.msra.mxu0 0.0
        %915 = vmatprep.subr.mxu0 0.0
        %916 = vmatpush1.msra.mxu0 0.0
        %917 = vmatprep.subr.mxu0 0.0
        %918 = vmatpush1.msra.mxu0 0.0
        %919 = vmatprep.subr.mxu0 0.0
        %920 = vmatpush1.msra.mxu0 0.0
        %921 = vmatprep.subr.mxu0 0.0
        %922 = vmatpush1.msra.mxu0 0.0
        %923 = vmatprep.subr.mxu0 0.0
        %924 = vmatpush1.msra.mxu0 0.0
        %925 = vmatprep.subr.mxu0 0.0
        %926 = vmatpush1.msra.mxu0 0.0
        %927 = vmatprep.subr.mxu0 0.0
        %928 = vmatpush1.msra.mxu0 0.0
        %929 = vmatprep.subr.mxu0 0.0
        %930 = vmatpush1.msra.mxu0 0.0
        %931 = vmatprep.subr.mxu0 0.0
        %932 = vmatpush1.msra.mxu0 0.0
        %933 = vmatprep.subr.mxu0 0.0
        %934 = vmatpush1.msra.mxu0 0.0
        %935 = vmatprep.subr.mxu0 0.0
        %936 = vmatpush1.msra.mxu0 0.0
        %937 = vmatprep.subr.mxu0 0.0
        %938 = vmatpush1.msra.mxu0 0.0
        %939 = vmatprep.subr.mxu0 0.0
        %940 = vmatpush1.msra.mxu0 0.0
        %941 = vmatprep.subr.mxu0 0.0
        %942 = vmatpush1.msra.mxu0 0.0
        %943 = vmatprep.subr.mxu0 0.0
        %944 = vmatpush1.msra.mxu0 0.0
        %945 = vmatprep.subr.mxu0 0.0
        %946 = vmatpush1.msra.mxu0 0.0
        %947 = vmatprep.subr.mxu0 0.0
        %948 = vmatpush1.msra.mxu0 0.0
        %949 = vmatprep.subr.mxu0 0.0
        %950 = vmatpush1.msra.mxu0 0.0
        %951 = vmatprep.subr.mxu0 0.0
        %952 = vmatpush1.msra.mxu0 0.0
        %953 = vmatprep.mubr.f32.mxu0 0.0
        %954 = vmatmul.mubr.f32.gmra.mrb[0].mxu0 %v862
        %v955 = vpop.f32.mrb[0].mxu0
        %v956 = vadd.f32 0.0, %v955
        %v957 = vpop.f32.mrb[0].mxu0
        %958 = vmatprep.mubr.f32.mxu0 0.0
        %959 = vmatmul.mubr.f32.gmra.mrb[0].mxu0 %v865
        %v960 = vpop.f32.mrb[0].mxu0
        %v961 = vadd.f32 0.0, %v960
        %v962 = vpop.f32.mrb[0].mxu0
        %963 = vmatprep.mubr.f32.mxu0 0.0
        %964 = vmatmul.mubr.f32.gmra.mrb[0].mxu0 %v868
        %v965 = vpop.f32.mrb[0].mxu0
        %v966 = vadd.f32 0.0, %v965
        %v967 = vpop.f32.mrb[0].mxu0
        %968 = vmatprep.mubr.f32.mxu0 0.0
        %969 = vmatmul.mubr.f32.gmra.mrb[0].mxu0 %v871
        %v970 = vpop.f32.mrb[0].mxu0
        %v971 = vadd.f32 0.0, %v970
        %v972 = vpop.f32.mrb[0].mxu0
        %973 = vmatprep.mubr.f32.mxu0 0.0
        %974 = vmatmul.mubr.f32.gmra.mrb[0].mxu0 %v874
        %v975 = vpop.f32.mrb[0].mxu0
        %v976 = vadd.f32 0.0, %v975
        %v977 = vpop.f32.mrb[0].mxu0
        %978 = vmatprep.mubr.f32.mxu0 0.0
        %979 = vmatmul.mubr.f32.gmra.mrb[0].mxu0 %v877
        %v980 = vpop.f32.mrb[0].mxu0
        %v981 = vadd.f32 0.0, %v980
        %v982 = vpop.f32.mrb[0].mxu0
        %983 = vmatprep.mubr.f32.mxu0 0.0
        %984 = vmatmul.mubr.f32.gmra.mrb[0].mxu0 %v880
        %v985 = vpop.f32.mrb[0].mxu0
        %v986 = vadd.f32 0.0, %v985
        %v987 = vpop.f32.mrb[0].mxu0
        %988 = vmatprep.mubr.f32.mxu0 0.0
        %989 = vmatmul.mubr.f32.gmra.mrb[0].mxu0 %v883
        %v990 = vpop.f32.mrb[0].mxu0
        %v991 = vadd.f32 0.0, %v990
        %v992 = vpop.f32.mrb[0].mxu0
        %993 = vdwg.mxu0
        %v995 = vsel %vm860, %v746, 0
        %v998 = vsel %vm860, %v748, 0
        %v1001 = vsel %vm860, %v750, 0
        %v1004 = vsel %vm860, %v752, 0
        %v1007 = vsel %vm860, %v754, 0
        %v1010 = vsel %vm860, %v756, 0
        %v1013 = vsel %vm860, %v758, 0
        %v1016 = vsel %vm860, %v760, 0
        %v1019 = vsel %vm885, %v797, 0
        %1021 = vmatprep.subr.mxu0 0.0
        %1022 = vmatpush1.msra.mxu0 %v1019
        %1023 = vmatprep.subr.mxu0 0.0
        %1024 = vmatpush1.msra.mxu0 0.0
        %1025 = vmatprep.subr.mxu0 0.0
        %1026 = vmatpush1.msra.mxu0 0.0
        %1027 = vmatprep.subr.mxu0 0.0
        %1028 = vmatpush1.msra.mxu0 0.0
        %1029 = vmatprep.subr.mxu0 0.0
        %1030 = vmatpush1.msra.mxu0 0.0
        %1031 = vmatprep.subr.mxu0 0.0
        %1032 = vmatpush1.msra.mxu0 0.0
        %1033 = vmatprep.subr.mxu0 0.0
        %1034 = vmatpush1.msra.mxu0 0.0
        %1035 = vmatprep.subr.mxu0 0.0
        %1036 = vmatpush1.msra.mxu0 0.0
        %1037 = vmatprep.subr.mxu0 0.0
        %1038 = vmatpush1.msra.mxu0 0.0
        %1039 = vmatprep.subr.mxu0 0.0
        %1040 = vmatpush1.msra.mxu0 0.0
        %1041 = vmatprep.subr.mxu0 0.0
        %1042 = vmatpush1.msra.mxu0 0.0
        %1043 = vmatprep.subr.mxu0 0.0
        %1044 = vmatpush1.msra.mxu0 0.0
        %1045 = vmatprep.subr.mxu0 0.0
        %1046 = vmatpush1.msra.mxu0 0.0
        %1047 = vmatprep.subr.mxu0 0.0
        %1048 = vmatpush1.msra.mxu0 0.0
        %1049 = vmatprep.subr.mxu0 0.0
        %1050 = vmatpush1.msra.mxu0 0.0
        %1051 = vmatprep.subr.mxu0 0.0
        %1052 = vmatpush1.msra.mxu0 0.0
        %1053 = vmatprep.subr.mxu0 0.0
        %1054 = vmatpush1.msra.mxu0 0.0
        %1055 = vmatprep.subr.mxu0 0.0
        %1056 = vmatpush1.msra.mxu0 0.0
        %1057 = vmatprep.subr.mxu0 0.0
        %1058 = vmatpush1.msra.mxu0 0.0
        %1059 = vmatprep.subr.mxu0 0.0
        %1060 = vmatpush1.msra.mxu0 0.0
        %1061 = vmatprep.subr.mxu0 0.0
        %1062 = vmatpush1.msra.mxu0 0.0
        %1063 = vmatprep.subr.mxu0 0.0
        %1064 = vmatpush1.msra.mxu0 0.0
        %1065 = vmatprep.subr.mxu0 0.0
        %1066 = vmatpush1.msra.mxu0 0.0
        %1067 = vmatprep.subr.mxu0 0.0
        %1068 = vmatpush1.msra.mxu0 0.0
        %1069 = vmatprep.subr.mxu0 0.0
        %1070 = vmatpush1.msra.mxu0 0.0
        %1071 = vmatprep.subr.mxu0 0.0
        %1072 = vmatpush1.msra.mxu0 0.0
        %1073 = vmatprep.subr.mxu0 0.0
        %1074 = vmatpush1.msra.mxu0 0.0
        %1075 = vmatprep.subr.mxu0 0.0
        %1076 = vmatpush1.msra.mxu0 0.0
        %1077 = vmatprep.subr.mxu0 0.0
        %1078 = vmatpush1.msra.mxu0 0.0
        %1079 = vmatprep.subr.mxu0 0.0
        %1080 = vmatpush1.msra.mxu0 0.0
        %1081 = vmatprep.subr.mxu0 0.0
        %1082 = vmatpush1.msra.mxu0 0.0
        %1083 = vmatprep.subr.mxu0 0.0
        %1084 = vmatpush1.msra.mxu0 0.0
        %1085 = vmatprep.mubr.f32.mxu0 0.0
        %1086 = vmatmul.mubr.f32.gmra.mrb[0].mxu0 %v995
        %v1087 = vpop.f32.mrb[0].mxu0
        %v1088 = vadd.f32 %v956, %v1087
        %v1089 = vpop.f32.mrb[0].mxu0
        %1090 = vmatprep.mubr.f32.mxu0 0.0
        %1091 = vmatmul.mubr.f32.gmra.mrb[0].mxu0 %v998
        %v1092 = vpop.f32.mrb[0].mxu0
        %v1093 = vadd.f32 %v961, %v1092
        %v1094 = vpop.f32.mrb[0].mxu0
        %1095 = vmatprep.mubr.f32.mxu0 0.0
        %1096 = vmatmul.mubr.f32.gmra.mrb[0].mxu0 %v1001
        %v1097 = vpop.f32.mrb[0].mxu0
        %v1098 = vadd.f32 %v966, %v1097
        %v1099 = vpop.f32.mrb[0].mxu0
        %1100 = vmatprep.mubr.f32.mxu0 0.0
        %1101 = vmatmul.mubr.f32.gmra.mrb[0].mxu0 %v1004
        %v1102 = vpop.f32.mrb[0].mxu0
        %v1103 = vadd.f32 %v971, %v1102
        %v1104 = vpop.f32.mrb[0].mxu0
        %1105 = vmatprep.mubr.f32.mxu0 0.0
        %1106 = vmatmul.mubr.f32.gmra.mrb[0].mxu0 %v1007
        %v1107 = vpop.f32.mrb[0].mxu0
        %v1108 = vadd.f32 %v976, %v1107
        %v1109 = vpop.f32.mrb[0].mxu0
        %1110 = vmatprep.mubr.f32.mxu0 0.0
        %1111 = vmatmul.mubr.f32.gmra.mrb[0].mxu0 %v1010
        %v1112 = vpop.f32.mrb[0].mxu0
        %v1113 = vadd.f32 %v981, %v1112
        %v1114 = vpop.f32.mrb[0].mxu0
        %1115 = vmatprep.mubr.f32.mxu0 0.0
        %1116 = vmatmul.mubr.f32.gmra.mrb[0].mxu0 %v1013
        %v1117 = vpop.f32.mrb[0].mxu0
        %v1118 = vadd.f32 %v986, %v1117
        %v1119 = vpop.f32.mrb[0].mxu0
        %1120 = vmatprep.mubr.f32.mxu0 0.0
        %1121 = vmatmul.mubr.f32.gmra.mrb[0].mxu0 %v1016
        %v1122 = vpop.f32.mrb[0].mxu0
        %v1123 = vadd.f32 %v991, %v1122
        %v1124 = vpop.f32.mrb[0].mxu0
        %1125 = vdwg.mxu0
        %v1126 = vsel %vm834, -1e+30, %v762
        %v1127 = vsel %vm835, -1e+30, %v763
        %v1128 = vsel %vm836, -1e+30, %v764
        %v1129 = vsel %vm837, -1e+30, %v765
        %v1130 = vsel %vm838, -1e+30, %v766
        %v1131 = vsel %vm839, -1e+30, %v767
        %v1132 = vsel %vm840, -1e+30, %v768
        %v1133 = vsel %vm841, -1e+30, %v769
        %v1134 = vmax.f32 %v852, %v1126
        %v1135 = vmax.f32 %v853, %v1127
        %v1136 = vmax.f32 %v854, %v1128
        %v1137 = vmax.f32 %v855, %v1129
        %v1138 = vmax.f32 %v856, %v1130
        %v1139 = vmax.f32 %v857, %v1131
        %v1140 = vmax.f32 %v858, %v1132
        %v1141 = vmax.f32 %v859, %v1133
        %vm1150 = vcmask 1046528
        %v1151 = vrot.slane %v746, 1
        %v1152 = vrot.slane %v747, 1
        %v1153 = vsel %vm1150, %v1151, %v1152
        %v1154 = vrot.slane %v748, 1
        %v1155 = vrot.slane %v749, 1
        %v1156 = vsel %vm1150, %v1154, %v1155
        %v1157 = vrot.slane %v750, 1
        %v1158 = vrot.slane %v751, 1
        %v1159 = vsel %vm1150, %v1157, %v1158
        %v1160 = vrot.slane %v752, 1
        %v1161 = vrot.slane %v753, 1
        %v1162 = vsel %vm1150, %v1160, %v1161
        %v1163 = vrot.slane %v754, 1
        %v1164 = vrot.slane %v755, 1
        %v1165 = vsel %vm1150, %v1163, %v1164
        %v1166 = vrot.slane %v756, 1
        %v1167 = vrot.slane %v757, 1
        %v1168 = vsel %vm1150, %v1166, %v1167
        %v1169 = vrot.slane %v758, 1
        %v1170 = vrot.slane %v759, 1
        %v1171 = vsel %vm1150, %v1169, %v1170
        %v1172 = vrot.slane %v760, 1
        %v1173 = vrot.slane %v761, 1
        %v1174 = vsel %vm1150, %v1172, %v1173
        %v1175 = vsel %vm860, %v1153, 0
        %v1177 = vsel %vm860, %v1156, 0
        %v1179 = vsel %vm860, %v1159, 0
        %v1181 = vsel %vm860, %v1162, 0
        %v1183 = vsel %vm860, %v1165, 0
        %v1185 = vsel %vm860, %v1168, 0
        %v1187 = vsel %vm860, %v1171, 0
        %v1189 = vsel %vm860, %v1174, 0
        %v1192 = vsel %vm885, %v799, 0
        %1194 = vmatprep.subr.mxu0 0.0
        %1195 = vmatpush1.msra.mxu0 %v1192
        %1196 = vmatprep.subr.mxu0 0.0
        %1197 = vmatpush1.msra.mxu0 0.0
        %1198 = vmatprep.subr.mxu0 0.0
        %1199 = vmatpush1.msra.mxu0 0.0
        %1200 = vmatprep.subr.mxu0 0.0
        %1201 = vmatpush1.msra.mxu0 0.0
        %1202 = vmatprep.subr.mxu0 0.0
        %1203 = vmatpush1.msra.mxu0 0.0
        %1204 = vmatprep.subr.mxu0 0.0
        %1205 = vmatpush1.msra.mxu0 0.0
        %1206 = vmatprep.subr.mxu0 0.0
        %1207 = vmatpush1.msra.mxu0 0.0
        %1208 = vmatprep.subr.mxu0 0.0
        %1209 = vmatpush1.msra.mxu0 0.0
        %1210 = vmatprep.subr.mxu0 0.0
        %1211 = vmatpush1.msra.mxu0 0.0
        %1212 = vmatprep.subr.mxu0 0.0
        %1213 = vmatpush1.msra.mxu0 0.0
        %1214 = vmatprep.subr.mxu0 0.0
        %1215 = vmatpush1.msra.mxu0 0.0
        %1216 = vmatprep.subr.mxu0 0.0
        %1217 = vmatpush1.msra.mxu0 0.0
        %1218 = vmatprep.subr.mxu0 0.0
        %1219 = vmatpush1.msra.mxu0 0.0
        %1220 = vmatprep.subr.mxu0 0.0
        %1221 = vmatpush1.msra.mxu0 0.0
        %1222 = vmatprep.subr.mxu0 0.0
        %1223 = vmatpush1.msra.mxu0 0.0
        %1224 = vmatprep.subr.mxu0 0.0
        %1225 = vmatpush1.msra.mxu0 0.0
        %1226 = vmatprep.subr.mxu0 0.0
        %1227 = vmatpush1.msra.mxu0 0.0
        %1228 = vmatprep.subr.mxu0 0.0
        %1229 = vmatpush1.msra.mxu0 0.0
        %1230 = vmatprep.subr.mxu0 0.0
        %1231 = vmatpush1.msra.mxu0 0.0
        %1232 = vmatprep.subr.mxu0 0.0
        %1233 = vmatpush1.msra.mxu0 0.0
        %1234 = vmatprep.subr.mxu0 0.0
        %1235 = vmatpush1.msra.mxu0 0.0
        %1236 = vmatprep.subr.mxu0 0.0
        %1237 = vmatpush1.msra.mxu0 0.0
        %1238 = vmatprep.subr.mxu0 0.0
        %1239 = vmatpush1.msra.mxu0 0.0
        %1240 = vmatprep.subr.mxu0 0.0
        %1241 = vmatpush1.msra.mxu0 0.0
        %1242 = vmatprep.subr.mxu0 0.0
        %1243 = vmatpush1.msra.mxu0 0.0
        %1244 = vmatprep.subr.mxu0 0.0
        %1245 = vmatpush1.msra.mxu0 0.0
        %1246 = vmatprep.subr.mxu0 0.0
        %1247 = vmatpush1.msra.mxu0 0.0
        %1248 = vmatprep.subr.mxu0 0.0
        %1249 = vmatpush1.msra.mxu0 0.0
        %1250 = vmatprep.subr.mxu0 0.0
        %1251 = vmatpush1.msra.mxu0 0.0
        %1252 = vmatprep.subr.mxu0 0.0
        %1253 = vmatpush1.msra.mxu0 0.0
        %1254 = vmatprep.subr.mxu0 0.0
        %1255 = vmatpush1.msra.mxu0 0.0
        %1256 = vmatprep.subr.mxu0 0.0
        %1257 = vmatpush1.msra.mxu0 0.0
        %1258 = vmatprep.mubr.f32.mxu0 0.0
        %1259 = vmatmul.mubr.f32.gmra.mrb[0].mxu0 %v1175
        %v1260 = vpop.f32.mrb[0].mxu0
        %v1261 = vadd.f32 0.0, %v1260
        %v1262 = vpop.f32.mrb[0].mxu0
        %1263 = vmatprep.mubr.f32.mxu0 0.0
        %1264 = vmatmul.mubr.f32.gmra.mrb[0].mxu0 %v1177
        %v1265 = vpop.f32.mrb[0].mxu0
        %v1266 = vadd.f32 0.0, %v1265
        %v1267 = vpop.f32.mrb[0].mxu0
        %1268 = vmatprep.mubr.f32.mxu0 0.0
        %1269 = vmatmul.mubr.f32.gmra.mrb[0].mxu0 %v1179
        %v1270 = vpop.f32.mrb[0].mxu0
        %v1271 = vadd.f32 0.0, %v1270
        %v1272 = vpop.f32.mrb[0].mxu0
        %1273 = vmatprep.mubr.f32.mxu0 0.0
        %1274 = vmatmul.mubr.f32.gmra.mrb[0].mxu0 %v1181
        %v1275 = vpop.f32.mrb[0].mxu0
        %v1276 = vadd.f32 0.0, %v1275
        %v1277 = vpop.f32.mrb[0].mxu0
        %1278 = vmatprep.mubr.f32.mxu0 0.0
        %1279 = vmatmul.mubr.f32.gmra.mrb[0].mxu0 %v1183
        %v1280 = vpop.f32.mrb[0].mxu0
        %v1281 = vadd.f32 0.0, %v1280
        %v1282 = vpop.f32.mrb[0].mxu0
        %1283 = vmatprep.mubr.f32.mxu0 0.0
        %1284 = vmatmul.mubr.f32.gmra.mrb[0].mxu0 %v1185
        %v1285 = vpop.f32.mrb[0].mxu0
        %v1286 = vadd.f32 0.0, %v1285
        %v1287 = vpop.f32.mrb[0].mxu0
        %1288 = vmatprep.mubr.f32.mxu0 0.0
        %1289 = vmatmul.mubr.f32.gmra.mrb[0].mxu0 %v1187
        %v1290 = vpop.f32.mrb[0].mxu0
        %v1291 = vadd.f32 0.0, %v1290
        %v1292 = vpop.f32.mrb[0].mxu0
        %1293 = vmatprep.mubr.f32.mxu0 0.0
        %1294 = vmatmul.mubr.f32.gmra.mrb[0].mxu0 %v1189
        %v1295 = vpop.f32.mrb[0].mxu0
        %v1296 = vadd.f32 0.0, %v1295
        %v1297 = vpop.f32.mrb[0].mxu0
        %1298 = vdwg.mxu0
        %v1299 = vadd.f32 %v1088, %v1261
        %v1300 = vadd.f32 %v1093, %v1266
        %v1301 = vadd.f32 %v1098, %v1271
        %v1302 = vadd.f32 %v1103, %v1276
        %v1303 = vadd.f32 %v1108, %v1281
        %v1304 = vadd.f32 %v1113, %v1286
        %v1305 = vadd.f32 %v1118, %v1291
        %v1306 = vadd.f32 %v1123, %v1296
        %v1307 = vsel %vm834, -1e+30, %v747
        %v1308 = vsel %vm835, -1e+30, %v749
        %v1309 = vsel %vm836, -1e+30, %v751
        %v1310 = vsel %vm837, -1e+30, %v753
        %v1311 = vsel %vm838, -1e+30, %v755
        %v1312 = vsel %vm839, -1e+30, %v757
        %v1313 = vsel %vm840, -1e+30, %v759
        %v1314 = vsel %vm841, -1e+30, %v761
        %v1331 = vrot.slane %v842, 1
        %v1332 = vrot.slane %v1307, 1
        %v1333 = vsel %vm1150, %v1331, %v1332
        %v1334 = vrot.slane %v843, 1
        %v1335 = vrot.slane %v1308, 1
        %v1336 = vsel %vm1150, %v1334, %v1335
        %v1337 = vrot.slane %v844, 1
        %v1338 = vrot.slane %v1309, 1
        %v1339 = vsel %vm1150, %v1337, %v1338
        %v1340 = vrot.slane %v845, 1
        %v1341 = vrot.slane %v1310, 1
        %v1342 = vsel %vm1150, %v1340, %v1341
        %v1343 = vrot.slane %v846, 1
        %v1344 = vrot.slane %v1311, 1
        %v1345 = vsel %vm1150, %v1343, %v1344
        %v1346 = vrot.slane %v847, 1
        %v1347 = vrot.slane %v1312, 1
        %v1348 = vsel %vm1150, %v1346, %v1347
        %v1349 = vrot.slane %v848, 1
        %v1350 = vrot.slane %v1313, 1
        %v1351 = vsel %vm1150, %v1349, %v1350
        %v1352 = vrot.slane %v849, 1
        %v1353 = vrot.slane %v1314, 1
        %v1354 = vsel %vm1150, %v1352, %v1353
        %v1363 = vmax.f32 %v1134, %v1333
        %v1364 = vmax.f32 %v1135, %v1336
        %v1365 = vmax.f32 %v1136, %v1339
        %v1366 = vmax.f32 %v1137, %v1342
        %v1367 = vmax.f32 %v1138, %v1345
        %v1368 = vmax.f32 %v1139, %v1348
        %v1369 = vmax.f32 %v1140, %v1351
        %v1370 = vmax.f32 %v1141, %v1354
        %v1372 = vsel %vm860, %v770, 0
        %v1375 = vsel %vm860, %v772, 0
        %v1378 = vsel %vm860, %v774, 0
        %v1381 = vsel %vm860, %v776, 0
        %v1384 = vsel %vm860, %v778, 0
        %v1387 = vsel %vm860, %v780, 0
        %v1390 = vsel %vm860, %v782, 0
        %v1393 = vsel %vm860, %v784, 0
        %v1396 = vsel %vm885, %v800, 0
        %1398 = vmatprep.subr.mxu0 0.0
        %1399 = vmatpush1.msra.mxu0 %v1396
        %1400 = vmatprep.subr.mxu0 0.0
        %1401 = vmatpush1.msra.mxu0 0.0
        %1402 = vmatprep.subr.mxu0 0.0
        %1403 = vmatpush1.msra.mxu0 0.0
        %1404 = vmatprep.subr.mxu0 0.0
        %1405 = vmatpush1.msra.mxu0 0.0
        %1406 = vmatprep.subr.mxu0 0.0
        %1407 = vmatpush1.msra.mxu0 0.0
        %1408 = vmatprep.subr.mxu0 0.0
        %1409 = vmatpush1.msra.mxu0 0.0
        %1410 = vmatprep.subr.mxu0 0.0
        %1411 = vmatpush1.msra.mxu0 0.0
        %1412 = vmatprep.subr.mxu0 0.0
        %1413 = vmatpush1.msra.mxu0 0.0
        %1414 = vmatprep.subr.mxu0 0.0
        %1415 = vmatpush1.msra.mxu0 0.0
        %1416 = vmatprep.subr.mxu0 0.0
        %1417 = vmatpush1.msra.mxu0 0.0
        %1418 = vmatprep.subr.mxu0 0.0
        %1419 = vmatpush1.msra.mxu0 0.0
        %1420 = vmatprep.subr.mxu0 0.0
        %1421 = vmatpush1.msra.mxu0 0.0
        %1422 = vmatprep.subr.mxu0 0.0
        %1423 = vmatpush1.msra.mxu0 0.0
        %1424 = vmatprep.subr.mxu0 0.0
        %1425 = vmatpush1.msra.mxu0 0.0
        %1426 = vmatprep.subr.mxu0 0.0
        %1427 = vmatpush1.msra.mxu0 0.0
        %1428 = vmatprep.subr.mxu0 0.0
        %1429 = vmatpush1.msra.mxu0 0.0
        %1430 = vmatprep.subr.mxu0 0.0
        %1431 = vmatpush1.msra.mxu0 0.0
        %1432 = vmatprep.subr.mxu0 0.0
        %1433 = vmatpush1.msra.mxu0 0.0
        %1434 = vmatprep.subr.mxu0 0.0
        %1435 = vmatpush1.msra.mxu0 0.0
        %1436 = vmatprep.subr.mxu0 0.0
        %1437 = vmatpush1.msra.mxu0 0.0
        %1438 = vmatprep.subr.mxu0 0.0
        %1439 = vmatpush1.msra.mxu0 0.0
        %1440 = vmatprep.subr.mxu0 0.0
        %1441 = vmatpush1.msra.mxu0 0.0
        %1442 = vmatprep.subr.mxu0 0.0
        %1443 = vmatpush1.msra.mxu0 0.0
        %1444 = vmatprep.subr.mxu0 0.0
        %1445 = vmatpush1.msra.mxu0 0.0
        %1446 = vmatprep.subr.mxu0 0.0
        %1447 = vmatpush1.msra.mxu0 0.0
        %1448 = vmatprep.subr.mxu0 0.0
        %1449 = vmatpush1.msra.mxu0 0.0
        %1450 = vmatprep.subr.mxu0 0.0
        %1451 = vmatpush1.msra.mxu0 0.0
        %1452 = vmatprep.subr.mxu0 0.0
        %1453 = vmatpush1.msra.mxu0 0.0
        %1454 = vmatprep.subr.mxu0 0.0
        %1455 = vmatpush1.msra.mxu0 0.0
        %1456 = vmatprep.subr.mxu0 0.0
        %1457 = vmatpush1.msra.mxu0 0.0
        %1458 = vmatprep.subr.mxu0 0.0
        %1459 = vmatpush1.msra.mxu0 0.0
        %1460 = vmatprep.subr.mxu0 0.0
        %1461 = vmatpush1.msra.mxu0 0.0
        %1462 = vmatprep.mubr.f32.mxu0 0.0
        %1463 = vmatmul.mubr.f32.gmra.mrb[0].mxu0 %v1372
        %v1464 = vpop.f32.mrb[0].mxu0
        %v1465 = vadd.f32 0.0, %v1464
        %v1466 = vpop.f32.mrb[0].mxu0
        %1467 = vmatprep.mubr.f32.mxu0 0.0
        %1468 = vmatmul.mubr.f32.gmra.mrb[0].mxu0 %v1375
        %v1469 = vpop.f32.mrb[0].mxu0
        %v1470 = vadd.f32 0.0, %v1469
        %v1471 = vpop.f32.mrb[0].mxu0
        %1472 = vmatprep.mubr.f32.mxu0 0.0
        %1473 = vmatmul.mubr.f32.gmra.mrb[0].mxu0 %v1378
        %v1474 = vpop.f32.mrb[0].mxu0
        %v1475 = vadd.f32 0.0, %v1474
        %v1476 = vpop.f32.mrb[0].mxu0
        %1477 = vmatprep.mubr.f32.mxu0 0.0
        %1478 = vmatmul.mubr.f32.gmra.mrb[0].mxu0 %v1381
        %v1479 = vpop.f32.mrb[0].mxu0
        %v1480 = vadd.f32 0.0, %v1479
        %v1481 = vpop.f32.mrb[0].mxu0
        %1482 = vmatprep.mubr.f32.mxu0 0.0
        %1483 = vmatmul.mubr.f32.gmra.mrb[0].mxu0 %v1384
        %v1484 = vpop.f32.mrb[0].mxu0
        %v1485 = vadd.f32 0.0, %v1484
        %v1486 = vpop.f32.mrb[0].mxu0
        %1487 = vmatprep.mubr.f32.mxu0 0.0
        %1488 = vmatmul.mubr.f32.gmra.mrb[0].mxu0 %v1387
        %v1489 = vpop.f32.mrb[0].mxu0
        %v1490 = vadd.f32 0.0, %v1489
        %v1491 = vpop.f32.mrb[0].mxu0
        %1492 = vmatprep.mubr.f32.mxu0 0.0
        %1493 = vmatmul.mubr.f32.gmra.mrb[0].mxu0 %v1390
        %v1494 = vpop.f32.mrb[0].mxu0
        %v1495 = vadd.f32 0.0, %v1494
        %v1496 = vpop.f32.mrb[0].mxu0
        %1497 = vmatprep.mubr.f32.mxu0 0.0
        %1498 = vmatmul.mubr.f32.gmra.mrb[0].mxu0 %v1393
        %v1499 = vpop.f32.mrb[0].mxu0
        %v1500 = vadd.f32 0.0, %v1499
        %v1501 = vpop.f32.mrb[0].mxu0
        %1502 = vdwg.mxu0
        %v1503 = vadd.f32 %v1299, %v1465
        %v1504 = vadd.f32 %v1300, %v1470
        %v1505 = vadd.f32 %v1301, %v1475
        %v1506 = vadd.f32 %v1302, %v1480
        %v1507 = vadd.f32 %v1303, %v1485
        %v1508 = vadd.f32 %v1304, %v1490
        %v1509 = vadd.f32 %v1305, %v1495
        %v1510 = vadd.f32 %v1306, %v1500
        %v1511 = vsel %vm851, -1e+30, %v770
        %v1512 = vsel %vm851, -1e+30, %v772
        %v1513 = vsel %vm851, -1e+30, %v774
        %v1514 = vsel %vm851, -1e+30, %v776
        %v1515 = vsel %vm851, -1e+30, %v778
        %v1516 = vsel %vm851, -1e+30, %v780
        %v1517 = vsel %vm851, -1e+30, %v782
        %v1518 = vsel %vm851, -1e+30, %v784
        %v1519 = vmax.f32 %v1363, %v1511
        %v1520 = vmax.f32 %v1364, %v1512
        %v1521 = vmax.f32 %v1365, %v1513
        %v1522 = vmax.f32 %v1366, %v1514
        %v1523 = vmax.f32 %v1367, %v1515
        %v1524 = vmax.f32 %v1368, %v1516
        %v1525 = vmax.f32 %v1369, %v1517
        %v1526 = vmax.f32 %v1370, %v1518
        %v1528 = vsel %vm860, %v786, 0
        %v1531 = vsel %vm860, %v787, 0
        %v1534 = vsel %vm860, %v788, 0
        %v1537 = vsel %vm860, %v789, 0
        %v1540 = vsel %vm860, %v790, 0
        %v1543 = vsel %vm860, %v791, 0
        %v1546 = vsel %vm860, %v792, 0
        %v1549 = vsel %vm860, %v793, 0
        %v1552 = vsel %vm885, %v801, 0
        %1554 = vmatprep.subr.mxu0 0.0
        %1555 = vmatpush1.msra.mxu0 %v1552
        %1556 = vmatprep.subr.mxu0 0.0
        %1557 = vmatpush1.msra.mxu0 0.0
        %1558 = vmatprep.subr.mxu0 0.0
        %1559 = vmatpush1.msra.mxu0 0.0
        %1560 = vmatprep.subr.mxu0 0.0
        %1561 = vmatpush1.msra.mxu0 0.0
        %1562 = vmatprep.subr.mxu0 0.0
        %1563 = vmatpush1.msra.mxu0 0.0
        %1564 = vmatprep.subr.mxu0 0.0
        %1565 = vmatpush1.msra.mxu0 0.0
        %1566 = vmatprep.subr.mxu0 0.0
        %1567 = vmatpush1.msra.mxu0 0.0
        %1568 = vmatprep.subr.mxu0 0.0
        %1569 = vmatpush1.msra.mxu0 0.0
        %1570 = vmatprep.subr.mxu0 0.0
        %1571 = vmatpush1.msra.mxu0 0.0
        %1572 = vmatprep.subr.mxu0 0.0
        %1573 = vmatpush1.msra.mxu0 0.0
        %1574 = vmatprep.subr.mxu0 0.0
        %1575 = vmatpush1.msra.mxu0 0.0
        %1576 = vmatprep.subr.mxu0 0.0
        %1577 = vmatpush1.msra.mxu0 0.0
        %1578 = vmatprep.subr.mxu0 0.0
        %1579 = vmatpush1.msra.mxu0 0.0
        %1580 = vmatprep.subr.mxu0 0.0
        %1581 = vmatpush1.msra.mxu0 0.0
        %1582 = vmatprep.subr.mxu0 0.0
        %1583 = vmatpush1.msra.mxu0 0.0
        %1584 = vmatprep.subr.mxu0 0.0
        %1585 = vmatpush1.msra.mxu0 0.0
        %1586 = vmatprep.subr.mxu0 0.0
        %1587 = vmatpush1.msra.mxu0 0.0
        %1588 = vmatprep.subr.mxu0 0.0
        %1589 = vmatpush1.msra.mxu0 0.0
        %1590 = vmatprep.subr.mxu0 0.0
        %1591 = vmatpush1.msra.mxu0 0.0
        %1592 = vmatprep.subr.mxu0 0.0
        %1593 = vmatpush1.msra.mxu0 0.0
        %1594 = vmatprep.subr.mxu0 0.0
        %1595 = vmatpush1.msra.mxu0 0.0
        %1596 = vmatprep.subr.mxu0 0.0
        %1597 = vmatpush1.msra.mxu0 0.0
        %1598 = vmatprep.subr.mxu0 0.0
        %1599 = vmatpush1.msra.mxu0 0.0
        %1600 = vmatprep.subr.mxu0 0.0
        %1601 = vmatpush1.msra.mxu0 0.0
        %1602 = vmatprep.subr.mxu0 0.0
        %1603 = vmatpush1.msra.mxu0 0.0
        %1604 = vmatprep.subr.mxu0 0.0
        %1605 = vmatpush1.msra.mxu0 0.0
        %1606 = vmatprep.subr.mxu0 0.0
        %1607 = vmatpush1.msra.mxu0 0.0
        %1608 = vmatprep.subr.mxu0 0.0
        %1609 = vmatpush1.msra.mxu0 0.0
        %1610 = vmatprep.subr.mxu0 0.0
        %1611 = vmatpush1.msra.mxu0 0.0
        %1612 = vmatprep.subr.mxu0 0.0
        %1613 = vmatpush1.msra.mxu0 0.0
        %1614 = vmatprep.subr.mxu0 0.0
        %1615 = vmatpush1.msra.mxu0 0.0
        %1616 = vmatprep.subr.mxu0 0.0
        %1617 = vmatpush1.msra.mxu0 0.0
        %1618 = vmatprep.mubr.f32.mxu0 0.0
        %1619 = vmatmul.mubr.f32.gmra.mrb[0].mxu0 %v1528
        %v1620 = vpop.f32.mrb[0].mxu0
        %v1621 = vadd.f32 0.0, %v1620
        %v1622 = vpop.f32.mrb[0].mxu0
        %1623 = vmatprep.mubr.f32.mxu0 0.0
        %1624 = vmatmul.mubr.f32.gmra.mrb[0].mxu0 %v1531
        %v1625 = vpop.f32.mrb[0].mxu0
        %v1626 = vadd.f32 0.0, %v1625
        %v1627 = vpop.f32.mrb[0].mxu0
        %1628 = vmatprep.mubr.f32.mxu0 0.0
        %1629 = vmatmul.mubr.f32.gmra.mrb[0].mxu0 %v1534
        %v1630 = vpop.f32.mrb[0].mxu0
        %v1631 = vadd.f32 0.0, %v1630
        %v1632 = vpop.f32.mrb[0].mxu0
        %1633 = vmatprep.mubr.f32.mxu0 0.0
        %1634 = vmatmul.mubr.f32.gmra.mrb[0].mxu0 %v1537
        %v1635 = vpop.f32.mrb[0].mxu0
        %v1636 = vadd.f32 0.0, %v1635
        %v1637 = vpop.f32.mrb[0].mxu0
        %1638 = vmatprep.mubr.f32.mxu0 0.0
        %1639 = vmatmul.mubr.f32.gmra.mrb[0].mxu0 %v1540
        %v1640 = vpop.f32.mrb[0].mxu0
        %v1641 = vadd.f32 0.0, %v1640
        %v1642 = vpop.f32.mrb[0].mxu0
        %1643 = vmatprep.mubr.f32.mxu0 0.0
        %1644 = vmatmul.mubr.f32.gmra.mrb[0].mxu0 %v1543
        %v1645 = vpop.f32.mrb[0].mxu0
        %v1646 = vadd.f32 0.0, %v1645
        %v1647 = vpop.f32.mrb[0].mxu0
        %1648 = vmatprep.mubr.f32.mxu0 0.0
        %1649 = vmatmul.mubr.f32.gmra.mrb[0].mxu0 %v1546
        %v1650 = vpop.f32.mrb[0].mxu0
        %v1651 = vadd.f32 0.0, %v1650
        %v1652 = vpop.f32.mrb[0].mxu0
        %1653 = vmatprep.mubr.f32.mxu0 0.0
        %1654 = vmatmul.mubr.f32.gmra.mrb[0].mxu0 %v1549
        %v1655 = vpop.f32.mrb[0].mxu0
        %v1656 = vadd.f32 0.0, %v1655
        %v1657 = vpop.f32.mrb[0].mxu0
        %1658 = vdwg.mxu0
        %v1659 = vadd.f32 %v1503, %v1621
        %v1660 = vadd.f32 %v1504, %v1626
        %v1661 = vadd.f32 %v1505, %v1631
        %v1662 = vadd.f32 %v1506, %v1636
        %v1663 = vadd.f32 %v1507, %v1641
        %v1664 = vadd.f32 %v1508, %v1646
        %v1665 = vadd.f32 %v1509, %v1651
        %v1666 = vadd.f32 %v1510, %v1656
        %v1667 = vmax.f32 %v1519, %v786
        %v1668 = vmax.f32 %v1520, %v787
        %v1669 = vmax.f32 %v1521, %v788
        %v1670 = vmax.f32 %v1522, %v789
        %v1671 = vmax.f32 %v1523, %v790
        %v1672 = vmax.f32 %v1524, %v791
        %v1673 = vmax.f32 %v1525, %v792
        %v1674 = vmax.f32 %v1526, %v793
        %v1683 = vrot.slane %v770, 1
        %v1684 = vrot.slane %v771, 1
        %v1685 = vsel %vm1150, %v1683, %v1684
        %v1686 = vrot.slane %v772, 1
        %v1687 = vrot.slane %v773, 1
        %v1688 = vsel %vm1150, %v1686, %v1687
        %v1689 = vrot.slane %v774, 1
        %v1690 = vrot.slane %v775, 1
        %v1691 = vsel %vm1150, %v1689, %v1690
        %v1692 = vrot.slane %v776, 1
        %v1693 = vrot.slane %v777, 1
        %v1694 = vsel %vm1150, %v1692, %v1693
        %v1695 = vrot.slane %v778, 1
        %v1696 = vrot.slane %v779, 1
        %v1697 = vsel %vm1150, %v1695, %v1696
        %v1698 = vrot.slane %v780, 1
        %v1699 = vrot.slane %v781, 1
        %v1700 = vsel %vm1150, %v1698, %v1699
        %v1701 = vrot.slane %v782, 1
        %v1702 = vrot.slane %v783, 1
        %v1703 = vsel %vm1150, %v1701, %v1702
        %v1704 = vrot.slane %v784, 1
        %v1705 = vrot.slane %v785, 1
        %v1706 = vsel %vm1150, %v1704, %v1705
        %v1707 = vsel %vm860, %v1685, 0
        %v1709 = vsel %vm860, %v1688, 0
        %v1711 = vsel %vm860, %v1691, 0
        %v1713 = vsel %vm860, %v1694, 0
        %v1715 = vsel %vm860, %v1697, 0
        %v1717 = vsel %vm860, %v1700, 0
        %v1719 = vsel %vm860, %v1703, 0
        %v1721 = vsel %vm860, %v1706, 0
        %v1724 = vsel %vm885, %v802, 0
        %1726 = vmatprep.subr.mxu0 0.0
        %1727 = vmatpush1.msra.mxu0 %v1724
        %1728 = vmatprep.subr.mxu0 0.0
        %1729 = vmatpush1.msra.mxu0 0.0
        %1730 = vmatprep.subr.mxu0 0.0
        %1731 = vmatpush1.msra.mxu0 0.0
        %1732 = vmatprep.subr.mxu0 0.0
        %1733 = vmatpush1.msra.mxu0 0.0
        %1734 = vmatprep.subr.mxu0 0.0
        %1735 = vmatpush1.msra.mxu0 0.0
        %1736 = vmatprep.subr.mxu0 0.0
        %1737 = vmatpush1.msra.mxu0 0.0
        %1738 = vmatprep.subr.mxu0 0.0
        %1739 = vmatpush1.msra.mxu0 0.0
        %1740 = vmatprep.subr.mxu0 0.0
        %1741 = vmatpush1.msra.mxu0 0.0
        %1742 = vmatprep.subr.mxu0 0.0
        %1743 = vmatpush1.msra.mxu0 0.0
        %1744 = vmatprep.subr.mxu0 0.0
        %1745 = vmatpush1.msra.mxu0 0.0
        %1746 = vmatprep.subr.mxu0 0.0
        %1747 = vmatpush1.msra.mxu0 0.0
        %1748 = vmatprep.subr.mxu0 0.0
        %1749 = vmatpush1.msra.mxu0 0.0
        %1750 = vmatprep.subr.mxu0 0.0
        %1751 = vmatpush1.msra.mxu0 0.0
        %1752 = vmatprep.subr.mxu0 0.0
        %1753 = vmatpush1.msra.mxu0 0.0
        %1754 = vmatprep.subr.mxu0 0.0
        %1755 = vmatpush1.msra.mxu0 0.0
        %1756 = vmatprep.subr.mxu0 0.0
        %1757 = vmatpush1.msra.mxu0 0.0
        %1758 = vmatprep.subr.mxu0 0.0
        %1759 = vmatpush1.msra.mxu0 0.0
        %1760 = vmatprep.subr.mxu0 0.0
        %1761 = vmatpush1.msra.mxu0 0.0
        %1762 = vmatprep.subr.mxu0 0.0
        %1763 = vmatpush1.msra.mxu0 0.0
        %1764 = vmatprep.subr.mxu0 0.0
        %1765 = vmatpush1.msra.mxu0 0.0
        %1766 = vmatprep.subr.mxu0 0.0
        %1767 = vmatpush1.msra.mxu0 0.0
        %1768 = vmatprep.subr.mxu0 0.0
        %1769 = vmatpush1.msra.mxu0 0.0
        %1770 = vmatprep.subr.mxu0 0.0
        %1771 = vmatpush1.msra.mxu0 0.0
        %1772 = vmatprep.subr.mxu0 0.0
        %1773 = vmatpush1.msra.mxu0 0.0
        %1774 = vmatprep.subr.mxu0 0.0
        %1775 = vmatpush1.msra.mxu0 0.0
        %1776 = vmatprep.subr.mxu0 0.0
        %1777 = vmatpush1.msra.mxu0 0.0
        %1778 = vmatprep.subr.mxu0 0.0
        %1779 = vmatpush1.msra.mxu0 0.0
        %1780 = vmatprep.subr.mxu0 0.0
        %1781 = vmatpush1.msra.mxu0 0.0
        %1782 = vmatprep.subr.mxu0 0.0
        %1783 = vmatpush1.msra.mxu0 0.0
        %1784 = vmatprep.subr.mxu0 0.0
        %1785 = vmatpush1.msra.mxu0 0.0
        %1786 = vmatprep.subr.mxu0 0.0
        %1787 = vmatpush1.msra.mxu0 0.0
        %1788 = vmatprep.subr.mxu0 0.0
        %1789 = vmatpush1.msra.mxu0 0.0
        %1790 = vmatprep.mubr.f32.mxu0 0.0
        %1791 = vmatmul.mubr.f32.gmra.mrb[0].mxu0 %v1707
        %v1792 = vpop.f32.mrb[0].mxu0
        %v1793 = vadd.f32 0.0, %v1792
        %v1794 = vpop.f32.mrb[0].mxu0
        %1795 = vmatprep.mubr.f32.mxu0 0.0
        %1796 = vmatmul.mubr.f32.gmra.mrb[0].mxu0 %v1709
        %v1797 = vpop.f32.mrb[0].mxu0
        %v1798 = vadd.f32 0.0, %v1797
        %v1799 = vpop.f32.mrb[0].mxu0
        %1800 = vmatprep.mubr.f32.mxu0 0.0
        %1801 = vmatmul.mubr.f32.gmra.mrb[0].mxu0 %v1711
        %v1802 = vpop.f32.mrb[0].mxu0
        %v1803 = vadd.f32 0.0, %v1802
        %v1804 = vpop.f32.mrb[0].mxu0
        %1805 = vmatprep.mubr.f32.mxu0 0.0
        %1806 = vmatmul.mubr.f32.gmra.mrb[0].mxu0 %v1713
        %v1807 = vpop.f32.mrb[0].mxu0
        %v1808 = vadd.f32 0.0, %v1807
        %v1809 = vpop.f32.mrb[0].mxu0
        %1810 = vmatprep.mubr.f32.mxu0 0.0
        %1811 = vmatmul.mubr.f32.gmra.mrb[0].mxu0 %v1715
        %v1812 = vpop.f32.mrb[0].mxu0
        %v1813 = vadd.f32 0.0, %v1812
        %v1814 = vpop.f32.mrb[0].mxu0
        %1815 = vmatprep.mubr.f32.mxu0 0.0
        %1816 = vmatmul.mubr.f32.gmra.mrb[0].mxu0 %v1717
        %v1817 = vpop.f32.mrb[0].mxu0
        %v1818 = vadd.f32 0.0, %v1817
        %v1819 = vpop.f32.mrb[0].mxu0
        %1820 = vmatprep.mubr.f32.mxu0 0.0
        %1821 = vmatmul.mubr.f32.gmra.mrb[0].mxu0 %v1719
        %v1822 = vpop.f32.mrb[0].mxu0
        %v1823 = vadd.f32 0.0, %v1822
        %v1824 = vpop.f32.mrb[0].mxu0
        %1825 = vmatprep.mubr.f32.mxu0 0.0
        %1826 = vmatmul.mubr.f32.gmra.mrb[0].mxu0 %v1721
        %v1827 = vpop.f32.mrb[0].mxu0
        %v1828 = vadd.f32 0.0, %v1827
        %v1829 = vpop.f32.mrb[0].mxu0
        %1830 = vdwg.mxu0
        %v1831 = vadd.f32 %v1659, %v1793
        %v1832 = vadd.f32 %v1660, %v1798
        %v1833 = vadd.f32 %v1661, %v1803
        %v1834 = vadd.f32 %v1662, %v1808
        %v1835 = vadd.f32 %v1663, %v1813
        %v1836 = vadd.f32 %v1664, %v1818
        %v1837 = vadd.f32 %v1665, %v1823
        %v1838 = vadd.f32 %v1666, %v1828
        %v1847 = vmax.f32 %v1667, %v1685
        %v1848 = vmax.f32 %v1668, %v1688
        %v1849 = vmax.f32 %v1669, %v1691
        %v1850 = vmax.f32 %v1670, %v1694
        %v1851 = vmax.f32 %v1671, %v1697
        %v1852 = vmax.f32 %v1672, %v1700
        %v1853 = vmax.f32 %v1673, %v1703
        %v1854 = vmax.f32 %v1674, %v1706
        %v1856 = vsel %vm860, %v794, 0
        %v1859 = vsel %vm885, %v803, 0
        %1861 = vmatprep.subr.mxu0 0.0
        %1862 = vmatpush1.msra.mxu0 %v1859
        %1863 = vmatprep.subr.mxu0 0.0
        %1864 = vmatpush1.msra.mxu0 0.0
        %1865 = vmatprep.subr.mxu0 0.0
        %1866 = vmatpush1.msra.mxu0 0.0
        %1867 = vmatprep.subr.mxu0 0.0
        %1868 = vmatpush1.msra.mxu0 0.0
        %1869 = vmatprep.subr.mxu0 0.0
        %1870 = vmatpush1.msra.mxu0 0.0
        %1871 = vmatprep.subr.mxu0 0.0
        %1872 = vmatpush1.msra.mxu0 0.0
        %1873 = vmatprep.subr.mxu0 0.0
        %1874 = vmatpush1.msra.mxu0 0.0
        %1875 = vmatprep.subr.mxu0 0.0
        %1876 = vmatpush1.msra.mxu0 0.0
        %1877 = vmatprep.subr.mxu0 0.0
        %1878 = vmatpush1.msra.mxu0 0.0
        %1879 = vmatprep.subr.mxu0 0.0
        %1880 = vmatpush1.msra.mxu0 0.0
        %1881 = vmatprep.subr.mxu0 0.0
        %1882 = vmatpush1.msra.mxu0 0.0
        %1883 = vmatprep.subr.mxu0 0.0
        %1884 = vmatpush1.msra.mxu0 0.0
        %1885 = vmatprep.subr.mxu0 0.0
        %1886 = vmatpush1.msra.mxu0 0.0
        %1887 = vmatprep.subr.mxu0 0.0
        %1888 = vmatpush1.msra.mxu0 0.0
        %1889 = vmatprep.subr.mxu0 0.0
        %1890 = vmatpush1.msra.mxu0 0.0
        %1891 = vmatprep.subr.mxu0 0.0
        %1892 = vmatpush1.msra.mxu0 0.0
        %1893 = vmatprep.subr.mxu0 0.0
        %1894 = vmatpush1.msra.mxu0 0.0
        %1895 = vmatprep.subr.mxu0 0.0
        %1896 = vmatpush1.msra.mxu0 0.0
        %1897 = vmatprep.subr.mxu0 0.0
        %1898 = vmatpush1.msra.mxu0 0.0
        %1899 = vmatprep.subr.mxu0 0.0
        %1900 = vmatpush1.msra.mxu0 0.0
        %1901 = vmatprep.subr.mxu0 0.0
        %1902 = vmatpush1.msra.mxu0 0.0
        %1903 = vmatprep.subr.mxu0 0.0
        %1904 = vmatpush1.msra.mxu0 0.0
        %1905 = vmatprep.subr.mxu0 0.0
        %1906 = vmatpush1.msra.mxu0 0.0
        %1907 = vmatprep.subr.mxu0 0.0
        %1908 = vmatpush1.msra.mxu0 0.0
        %1909 = vmatprep.subr.mxu0 0.0
        %1910 = vmatpush1.msra.mxu0 0.0
        %1911 = vmatprep.subr.mxu0 0.0
        %1912 = vmatpush1.msra.mxu0 0.0
        %1913 = vmatprep.subr.mxu0 0.0
        %1914 = vmatpush1.msra.mxu0 0.0
        %1915 = vmatprep.subr.mxu0 0.0
        %1916 = vmatpush1.msra.mxu0 0.0
        %1917 = vmatprep.subr.mxu0 0.0
        %1918 = vmatpush1.msra.mxu0 0.0
        %1919 = vmatprep.subr.mxu0 0.0
        %1920 = vmatpush1.msra.mxu0 0.0
        %1921 = vmatprep.subr.mxu0 0.0
        %1922 = vmatpush1.msra.mxu0 0.0
        %1923 = vmatprep.subr.mxu0 0.0
        %1924 = vmatpush1.msra.mxu0 0.0
        %1925 = vmatprep.mubr.f32.mxu0 0.0
        %1926 = vmatmul.mubr.f32.gmra.mrb[0].mxu0 %v998
        %v1927 = vpop.f32.mrb[0].mxu0
        %v1928 = vadd.f32 0.0, %v1927
        %v1929 = vpop.f32.mrb[0].mxu0
        %1930 = vmatprep.mubr.f32.mxu0 0.0
        %1931 = vmatmul.mubr.f32.gmra.mrb[0].mxu0 %v1001
        %v1932 = vpop.f32.mrb[0].mxu0
        %v1933 = vadd.f32 0.0, %v1932
        %v1934 = vpop.f32.mrb[0].mxu0
        %1935 = vmatprep.mubr.f32.mxu0 0.0
        %1936 = vmatmul.mubr.f32.gmra.mrb[0].mxu0 %v1004
        %v1937 = vpop.f32.mrb[0].mxu0
        %v1938 = vadd.f32 0.0, %v1937
        %v1939 = vpop.f32.mrb[0].mxu0
        %1940 = vmatprep.mubr.f32.mxu0 0.0
        %1941 = vmatmul.mubr.f32.gmra.mrb[0].mxu0 %v1007
        %v1942 = vpop.f32.mrb[0].mxu0
        %v1943 = vadd.f32 0.0, %v1942
        %v1944 = vpop.f32.mrb[0].mxu0
        %1945 = vmatprep.mubr.f32.mxu0 0.0
        %1946 = vmatmul.mubr.f32.gmra.mrb[0].mxu0 %v1010
        %v1947 = vpop.f32.mrb[0].mxu0
        %v1948 = vadd.f32 0.0, %v1947
        %v1949 = vpop.f32.mrb[0].mxu0
        %1950 = vmatprep.mubr.f32.mxu0 0.0
        %1951 = vmatmul.mubr.f32.gmra.mrb[0].mxu0 %v1013
        %v1952 = vpop.f32.mrb[0].mxu0
        %v1953 = vadd.f32 0.0, %v1952
        %v1954 = vpop.f32.mrb[0].mxu0
        %1955 = vmatprep.mubr.f32.mxu0 0.0
        %1956 = vmatmul.mubr.f32.gmra.mrb[0].mxu0 %v1016
        %v1957 = vpop.f32.mrb[0].mxu0
        %v1958 = vadd.f32 0.0, %v1957
        %v1959 = vpop.f32.mrb[0].mxu0
        %1960 = vmatprep.mubr.f32.mxu0 0.0
        %1961 = vmatmul.mubr.f32.gmra.mrb[0].mxu0 %v1856
        %v1962 = vpop.f32.mrb[0].mxu0
        %v1963 = vadd.f32 0.0, %v1962
        %v1964 = vpop.f32.mrb[0].mxu0
        %1965 = vdwg.mxu0
        %v1966 = vadd.f32 %v1831, %v1928
        %v1967 = vadd.f32 %v1832, %v1933
        %v1968 = vadd.f32 %v1833, %v1938
        %v1969 = vadd.f32 %v1834, %v1943
        %v1970 = vadd.f32 %v1835, %v1948
        %v1971 = vadd.f32 %v1836, %v1953
        %v1972 = vadd.f32 %v1837, %v1958
        %v1973 = vadd.f32 %v1838, %v1963
        %v1974 = vsel %vm851, -1e+30, %v748
        %v1975 = vsel %vm851, -1e+30, %v750
        %v1976 = vsel %vm851, -1e+30, %v752
        %v1977 = vsel %vm851, -1e+30, %v754
        %v1978 = vsel %vm851, -1e+30, %v756
        %v1979 = vsel %vm851, -1e+30, %v758
        %v1980 = vsel %vm851, -1e+30, %v760
        %v1981 = vsel %vm851, -1e+30, %v794
        %v1982 = vmax.f32 %v1847, %v1974
        %v1983 = vmax.f32 %v1848, %v1975
        %v1984 = vmax.f32 %v1849, %v1976
        %v1985 = vmax.f32 %v1850, %v1977
        %v1986 = vmax.f32 %v1851, %v1978
        %v1987 = vmax.f32 %v1852, %v1979
        %v1988 = vmax.f32 %v1853, %v1980
        %v1989 = vmax.f32 %v1854, %v1981
        %v1991 = vsel %vm860, %v796, 0
        %v1994 = vsel %vm885, %v804, 0
        %1996 = vmatprep.subr.mxu0 0.0
        %1997 = vmatpush1.msra.mxu0 %v1994
        %1998 = vmatprep.subr.mxu0 0.0
        %1999 = vmatpush1.msra.mxu0 0.0
        %2000 = vmatprep.subr.mxu0 0.0
        %2001 = vmatpush1.msra.mxu0 0.0
        %2002 = vmatprep.subr.mxu0 0.0
        %2003 = vmatpush1.msra.mxu0 0.0
        %2004 = vmatprep.subr.mxu0 0.0
        %2005 = vmatpush1.msra.mxu0 0.0
        %2006 = vmatprep.subr.mxu0 0.0
        %2007 = vmatpush1.msra.mxu0 0.0
        %2008 = vmatprep.subr.mxu0 0.0
        %2009 = vmatpush1.msra.mxu0 0.0
        %2010 = vmatprep.subr.mxu0 0.0
        %2011 = vmatpush1.msra.mxu0 0.0
        %2012 = vmatprep.subr.mxu0 0.0
        %2013 = vmatpush1.msra.mxu0 0.0
        %2014 = vmatprep.subr.mxu0 0.0
        %2015 = vmatpush1.msra.mxu0 0.0
        %2016 = vmatprep.subr.mxu0 0.0
        %2017 = vmatpush1.msra.mxu0 0.0
        %2018 = vmatprep.subr.mxu0 0.0
        %2019 = vmatpush1.msra.mxu0 0.0
        %2020 = vmatprep.subr.mxu0 0.0
        %2021 = vmatpush1.msra.mxu0 0.0
        %2022 = vmatprep.subr.mxu0 0.0
        %2023 = vmatpush1.msra.mxu0 0.0
        %2024 = vmatprep.subr.mxu0 0.0
        %2025 = vmatpush1.msra.mxu0 0.0
        %2026 = vmatprep.subr.mxu0 0.0
        %2027 = vmatpush1.msra.mxu0 0.0
        %2028 = vmatprep.subr.mxu0 0.0
        %2029 = vmatpush1.msra.mxu0 0.0
        %2030 = vmatprep.subr.mxu0 0.0
        %2031 = vmatpush1.msra.mxu0 0.0
        %2032 = vmatprep.subr.mxu0 0.0
        %2033 = vmatpush1.msra.mxu0 0.0
        %2034 = vmatprep.subr.mxu0 0.0
        %2035 = vmatpush1.msra.mxu0 0.0
        %2036 = vmatprep.subr.mxu0 0.0
        %2037 = vmatpush1.msra.mxu0 0.0
        %2038 = vmatprep.subr.mxu0 0.0
        %2039 = vmatpush1.msra.mxu0 0.0
        %2040 = vmatprep.subr.mxu0 0.0
        %2041 = vmatpush1.msra.mxu0 0.0
        %2042 = vmatprep.subr.mxu0 0.0
        %2043 = vmatpush1.msra.mxu0 0.0
        %2044 = vmatprep.subr.mxu0 0.0
        %2045 = vmatpush1.msra.mxu0 0.0
        %2046 = vmatprep.subr.mxu0 0.0
        %2047 = vmatpush1.msra.mxu0 0.0
        %2048 = vmatprep.subr.mxu0 0.0
        %2049 = vmatpush1.msra.mxu0 0.0
        %2050 = vmatprep.subr.mxu0 0.0
        %2051 = vmatpush1.msra.mxu0 0.0
        %2052 = vmatprep.subr.mxu0 0.0
        %2053 = vmatpush1.msra.mxu0 0.0
        %2054 = vmatprep.subr.mxu0 0.0
        %2055 = vmatpush1.msra.mxu0 0.0
        %2056 = vmatprep.subr.mxu0 0.0
        %2057 = vmatpush1.msra.mxu0 0.0
        %2058 = vmatprep.subr.mxu0 0.0
        %2059 = vmatpush1.msra.mxu0 0.0
        %2060 = vmatprep.mubr.f32.mxu0 0.0
        %2061 = vmatmul.mubr.f32.gmra.mrb[0].mxu0 %v865
        %v2062 = vpop.f32.mrb[0].mxu0
        %v2063 = vadd.f32 0.0, %v2062
        %v2064 = vpop.f32.mrb[0].mxu0
        %2065 = vmatprep.mubr.f32.mxu0 0.0
        %2066 = vmatmul.mubr.f32.gmra.mrb[0].mxu0 %v868
        %v2067 = vpop.f32.mrb[0].mxu0
        %v2068 = vadd.f32 0.0, %v2067
        %v2069 = vpop.f32.mrb[0].mxu0
        %2070 = vmatprep.mubr.f32.mxu0 0.0
        %2071 = vmatmul.mubr.f32.gmra.mrb[0].mxu0 %v871
        %v2072 = vpop.f32.mrb[0].mxu0
        %v2073 = vadd.f32 0.0, %v2072
        %v2074 = vpop.f32.mrb[0].mxu0
        %2075 = vmatprep.mubr.f32.mxu0 0.0
        %2076 = vmatmul.mubr.f32.gmra.mrb[0].mxu0 %v874
        %v2077 = vpop.f32.mrb[0].mxu0
        %v2078 = vadd.f32 0.0, %v2077
        %v2079 = vpop.f32.mrb[0].mxu0
        %2080 = vmatprep.mubr.f32.mxu0 0.0
        %2081 = vmatmul.mubr.f32.gmra.mrb[0].mxu0 %v877
        %v2082 = vpop.f32.mrb[0].mxu0
        %v2083 = vadd.f32 0.0, %v2082
        %v2084 = vpop.f32.mrb[0].mxu0
        %2085 = vmatprep.mubr.f32.mxu0 0.0
        %2086 = vmatmul.mubr.f32.gmra.mrb[0].mxu0 %v880
        %v2087 = vpop.f32.mrb[0].mxu0
        %v2088 = vadd.f32 0.0, %v2087
        %v2089 = vpop.f32.mrb[0].mxu0
        %2090 = vmatprep.mubr.f32.mxu0 0.0
        %2091 = vmatmul.mubr.f32.gmra.mrb[0].mxu0 %v883
        %v2092 = vpop.f32.mrb[0].mxu0
        %v2093 = vadd.f32 0.0, %v2092
        %v2094 = vpop.f32.mrb[0].mxu0
        %2095 = vmatprep.mubr.f32.mxu0 0.0
        %2096 = vmatmul.mubr.f32.gmra.mrb[0].mxu0 %v1991
        %v2097 = vpop.f32.mrb[0].mxu0
        %v2098 = vadd.f32 0.0, %v2097
        %v2099 = vpop.f32.mrb[0].mxu0
        %2100 = vdwg.mxu0
        %v2101 = vadd.f32 %v1966, %v2063
        %v2102 = vadd.f32 %v1967, %v2068
        %v2103 = vadd.f32 %v1968, %v2073
        %v2104 = vadd.f32 %v1969, %v2078
        %v2105 = vadd.f32 %v1970, %v2083
        %v2106 = vadd.f32 %v1971, %v2088
        %v2107 = vadd.f32 %v1972, %v2093
        %v2108 = vadd.f32 %v1973, %v2098
        %v2109 = vmax.f32 %v1982, %v763
        %v2110 = vmax.f32 %v1983, %v764
        %v2111 = vmax.f32 %v1984, %v765
        %v2112 = vmax.f32 %v1985, %v766
        %v2113 = vmax.f32 %v1986, %v767
        %v2114 = vmax.f32 %v1987, %v768
        %v2115 = vmax.f32 %v1988, %v769
        %v2116 = vmax.f32 %v1989, %v796
        %v2118 = vrot.slane %v794, 1
        %v2119 = vrot.slane %v795, 1
        %v2120 = vsel %vm1150, %v2118, %v2119
        %v2121 = vsel %vm860, %v2120, 0
        %v2124 = vsel %vm885, %v805, 0
        %2126 = vmatprep.subr.mxu0 0.0
        %2127 = vmatpush1.msra.mxu0 %v2124
        %2128 = vmatprep.subr.mxu0 0.0
        %2129 = vmatpush1.msra.mxu0 0.0
        %2130 = vmatprep.subr.mxu0 0.0
        %2131 = vmatpush1.msra.mxu0 0.0
        %2132 = vmatprep.subr.mxu0 0.0
        %2133 = vmatpush1.msra.mxu0 0.0
        %2134 = vmatprep.subr.mxu0 0.0
        %2135 = vmatpush1.msra.mxu0 0.0
        %2136 = vmatprep.subr.mxu0 0.0
        %2137 = vmatpush1.msra.mxu0 0.0
        %2138 = vmatprep.subr.mxu0 0.0
        %2139 = vmatpush1.msra.mxu0 0.0
        %2140 = vmatprep.subr.mxu0 0.0
        %2141 = vmatpush1.msra.mxu0 0.0
        %2142 = vmatprep.subr.mxu0 0.0
        %2143 = vmatpush1.msra.mxu0 0.0
        %2144 = vmatprep.subr.mxu0 0.0
        %2145 = vmatpush1.msra.mxu0 0.0
        %2146 = vmatprep.subr.mxu0 0.0
        %2147 = vmatpush1.msra.mxu0 0.0
        %2148 = vmatprep.subr.mxu0 0.0
        %2149 = vmatpush1.msra.mxu0 0.0
        %2150 = vmatprep.subr.mxu0 0.0
        %2151 = vmatpush1.msra.mxu0 0.0
        %2152 = vmatprep.subr.mxu0 0.0
        %2153 = vmatpush1.msra.mxu0 0.0
        %2154 = vmatprep.subr.mxu0 0.0
        %2155 = vmatpush1.msra.mxu0 0.0
        %2156 = vmatprep.subr.mxu0 0.0
        %2157 = vmatpush1.msra.mxu0 0.0
        %2158 = vmatprep.subr.mxu0 0.0
        %2159 = vmatpush1.msra.mxu0 0.0
        %2160 = vmatprep.subr.mxu0 0.0
        %2161 = vmatpush1.msra.mxu0 0.0
        %2162 = vmatprep.subr.mxu0 0.0
        %2163 = vmatpush1.msra.mxu0 0.0
        %2164 = vmatprep.subr.mxu0 0.0
        %2165 = vmatpush1.msra.mxu0 0.0
        %2166 = vmatprep.subr.mxu0 0.0
        %2167 = vmatpush1.msra.mxu0 0.0
        %2168 = vmatprep.subr.mxu0 0.0
        %2169 = vmatpush1.msra.mxu0 0.0
        %2170 = vmatprep.subr.mxu0 0.0
        %2171 = vmatpush1.msra.mxu0 0.0
        %2172 = vmatprep.subr.mxu0 0.0
        %2173 = vmatpush1.msra.mxu0 0.0
        %2174 = vmatprep.subr.mxu0 0.0
        %2175 = vmatpush1.msra.mxu0 0.0
        %2176 = vmatprep.subr.mxu0 0.0
        %2177 = vmatpush1.msra.mxu0 0.0
        %2178 = vmatprep.subr.mxu0 0.0
        %2179 = vmatpush1.msra.mxu0 0.0
        %2180 = vmatprep.subr.mxu0 0.0
        %2181 = vmatpush1.msra.mxu0 0.0
        %2182 = vmatprep.subr.mxu0 0.0
        %2183 = vmatpush1.msra.mxu0 0.0
        %2184 = vmatprep.subr.mxu0 0.0
        %2185 = vmatpush1.msra.mxu0 0.0
        %2186 = vmatprep.subr.mxu0 0.0
        %2187 = vmatpush1.msra.mxu0 0.0
        %2188 = vmatprep.subr.mxu0 0.0
        %2189 = vmatpush1.msra.mxu0 0.0
        %2190 = vmatprep.mubr.f32.mxu0 0.0
        %2191 = vmatmul.mubr.f32.gmra.mrb[0].mxu0 %v1177
        %v2192 = vpop.f32.mrb[0].mxu0
        %v2193 = vadd.f32 0.0, %v2192
        %v2194 = vpop.f32.mrb[0].mxu0
        %2195 = vmatprep.mubr.f32.mxu0 0.0
        %2196 = vmatmul.mubr.f32.gmra.mrb[0].mxu0 %v1179
        %v2197 = vpop.f32.mrb[0].mxu0
        %v2198 = vadd.f32 0.0, %v2197
        %v2199 = vpop.f32.mrb[0].mxu0
        %2200 = vmatprep.mubr.f32.mxu0 0.0
        %2201 = vmatmul.mubr.f32.gmra.mrb[0].mxu0 %v1181
        %v2202 = vpop.f32.mrb[0].mxu0
        %v2203 = vadd.f32 0.0, %v2202
        %v2204 = vpop.f32.mrb[0].mxu0
        %2205 = vmatprep.mubr.f32.mxu0 0.0
        %2206 = vmatmul.mubr.f32.gmra.mrb[0].mxu0 %v1183
        %v2207 = vpop.f32.mrb[0].mxu0
        %v2208 = vadd.f32 0.0, %v2207
        %v2209 = vpop.f32.mrb[0].mxu0
        %2210 = vmatprep.mubr.f32.mxu0 0.0
        %2211 = vmatmul.mubr.f32.gmra.mrb[0].mxu0 %v1185
        %v2212 = vpop.f32.mrb[0].mxu0
        %v2213 = vadd.f32 0.0, %v2212
        %v2214 = vpop.f32.mrb[0].mxu0
        %2215 = vmatprep.mubr.f32.mxu0 0.0
        %2216 = vmatmul.mubr.f32.gmra.mrb[0].mxu0 %v1187
        %v2217 = vpop.f32.mrb[0].mxu0
        %v2218 = vadd.f32 0.0, %v2217
        %v2219 = vpop.f32.mrb[0].mxu0
        %2220 = vmatprep.mubr.f32.mxu0 0.0
        %2221 = vmatmul.mubr.f32.gmra.mrb[0].mxu0 %v1189
        %v2222 = vpop.f32.mrb[0].mxu0
        %v2223 = vadd.f32 0.0, %v2222
        %v2224 = vpop.f32.mrb[0].mxu0
        %2225 = vmatprep.mubr.f32.mxu0 0.0
        %2226 = vmatmul.mubr.f32.gmra.mrb[0].mxu0 %v2121
        %v2227 = vpop.f32.mrb[0].mxu0
        %v2228 = vadd.f32 0.0, %v2227
        %v2229 = vpop.f32.mrb[0].mxu0
        %2230 = vdwg.mxu0
        %v2231 = vadd.f32 %v2101, %v2193
        %v2232 = vadd.f32 %v2102, %v2198
        %v2233 = vadd.f32 %v2103, %v2203
        %v2234 = vadd.f32 %v2104, %v2208
        %v2235 = vadd.f32 %v2105, %v2213
        %v2236 = vadd.f32 %v2106, %v2218
        %v2237 = vadd.f32 %v2107, %v2223
        %v2238 = vadd.f32 %v2108, %v2228
        %v2247 = vmax.f32 %v2109, %v1156
        %v2248 = vmax.f32 %v2110, %v1159
        %v2249 = vmax.f32 %v2111, %v1162
        %v2250 = vmax.f32 %v2112, %v1165
        %v2251 = vmax.f32 %v2113, %v1168
        %v2252 = vmax.f32 %v2114, %v1171
        %v2253 = vmax.f32 %v2115, %v1174
        %v2254 = vmax.f32 %v2116, %v2120
        %v2255 = vld [vmem:[%s4] sm:$0x1]
        %v2257 = vlaneseq
        %v2258 = vshrl.u32 %v2257, 7
        %v2259 = vsub.s32 0, %v2258
        %v2260 = vrot.slane %v2255, %v2259
        %v2262 = vmul.f32 %v2247, %v2260
        %v2263 = vmul.f32 %v2248, %v2260
        %v2264 = vmul.f32 %v2249, %v2260
        %v2265 = vmul.f32 %v2250, %v2260
        %v2266 = vmul.f32 %v2251, %v2260
        %v2267 = vmul.f32 %v2252, %v2260
        %v2268 = vmul.f32 %v2253, %v2260
        %v2269 = vmul.f32 %v2254, %v2260
        %v2270 = vld [vmem:[%s5] sm:$0x1]
        %v2272 = vlaneseq
        %v2273 = vshrl.u32 %v2272, 7
        %v2274 = vsub.s32 0, %v2273
        %v2275 = vrot.slane %v2270, %v2274
        %v2277 = vadd.f32 %v2262, %v2275
        %v2278 = vadd.f32 %v2263, %v2275
        %v2279 = vadd.f32 %v2264, %v2275
        %v2280 = vadd.f32 %v2265, %v2275
        %v2281 = vadd.f32 %v2266, %v2275
        %v2282 = vadd.f32 %v2267, %v2275
        %v2283 = vadd.f32 %v2268, %v2275
        %v2284 = vadd.f32 %v2269, %v2275
        %v2285 = vmax.f32 %v2277, 0.0
        %v2286 = vmax.f32 %v2278, 0.0
        %v2287 = vmax.f32 %v2279, 0.0
        %v2288 = vmax.f32 %v2280, 0.0
        %v2289 = vmax.f32 %v2281, 0.0
        %v2290 = vmax.f32 %v2282, 0.0
        %v2291 = vmax.f32 %v2283, 0.0
        %v2292 = vmax.f32 %v2284, 0.0
        %2293 = vst.msk [vmem:[%s734] sm:$0xff] %vm860, %v2285
        %2294 = vst.msk [vmem:[%s734 + $0x8] sm:$0xff] %vm860, %v2286
        %2295 = vst.msk [vmem:[%s734 + $0x10] sm:$0xff] %vm860, %v2287
        %2296 = vst.msk [vmem:[%s734 + $0x18] sm:$0xff] %vm860, %v2288
        %2297 = vst.msk [vmem:[%s734 + $0x20] sm:$0xff] %vm860, %v2289
        %2298 = vst.msk [vmem:[%s734 + $0x28] sm:$0xff] %vm860, %v2290
        %2299 = vst.msk [vmem:[%s734 + $0x30] sm:$0xff] %vm860, %v2291
        %2300 = vst.msk [vmem:[%s734 + $0x38] sm:$0xff] %vm860, %v2292
        %v2301 = vld [vmem:[%s3] sm:$0x1]
        %v2303 = vlaneseq
        %v2304 = vshrl.u32 %v2303, 7
        %v2305 = vsub.s32 0, %v2304
        %v2306 = vrot.slane %v2301, %v2305
        %v2308 = vadd.f32 %v2231, %v2306
        %v2309 = vadd.f32 %v2232, %v2306
        %v2310 = vadd.f32 %v2233, %v2306
        %v2311 = vadd.f32 %v2234, %v2306
        %v2312 = vadd.f32 %v2235, %v2306
        %v2313 = vadd.f32 %v2236, %v2306
        %v2314 = vadd.f32 %v2237, %v2306
        %v2315 = vadd.f32 %v2238, %v2306
        %v2316 = vmax.f32 %v2308, 0.0
        %v2317 = vmax.f32 %v2309, 0.0
        %v2318 = vmax.f32 %v2310, 0.0
        %v2319 = vmax.f32 %v2311, 0.0
        %v2320 = vmax.f32 %v2312, 0.0
        %v2321 = vmax.f32 %v2313, 0.0
        %v2322 = vmax.f32 %v2314, 0.0
        %v2323 = vmax.f32 %v2315, 0.0
        %2324 = vst.msk [vmem:[%s744] sm:$0xff] %vm860, %v2316
        %2325 = vst.msk [vmem:[%s744 + $0x8] sm:$0xff] %vm860, %v2317
        %2326 = vst.msk [vmem:[%s744 + $0x10] sm:$0xff] %vm860, %v2318
        %2327 = vst.msk [vmem:[%s744 + $0x18] sm:$0xff] %vm860, %v2319
        %2328 = vst.msk [vmem:[%s744 + $0x20] sm:$0xff] %vm860, %v2320
        %2329 = vst.msk [vmem:[%s744 + $0x28] sm:$0xff] %vm860, %v2321
        %2330 = vst.msk [vmem:[%s744 + $0x30] sm:$0xff] %vm860, %v2322
        %2331 = vst.msk [vmem:[%s744 + $0x38] sm:$0xff] %vm860, %v2323
        %s2332 = smul.u32 8, %s24
        %p2333 = scmp.lt.s32.totalorder %s23, 1
        %s2334 = scalar_select %p2333, %s23, 1
        %p2335 = scmp.lt.s32.totalorder %s2332, 7
        %s2336 = scalar_select %p2335, %s2332, 7
        %s2337 = smul.addr %s2334, 8
        %s2338 = sadd.s32 %s2336, %s2337
        %s2339 = smul.addr %s2338, 8
        %s2340 = scalar_lea.vmem %s6, %s2339
        %s2341 = smul.u32 8, %s24
        %p2342 = scmp.lt.s32.totalorder %s23, 1
        %s2343 = scalar_select %p2342, %s23, 1
        %p2344 = scmp.lt.s32.totalorder %s2341, 7
        %s2345 = scalar_select %p2344, %s2341, 7
        %s2346 = smul.addr %s2343, 8
        %s2347 = sadd.s32 %s2345, %s2346
        %s2348 = smul.addr %s2347, 8
        %s2349 = scalar_lea.vmem %s7, %s2348
        // Predicated region
        $region97: #{_lambda_.1} parent=91 // pred_check
          %p2350 = pneg %p191
        $region98: #{_lambda_.1} parent=91 // pred_check_branch
          %2352 = sbr.rel (%p2350) target = $region100
        $region99: #{_lambda_.1} parent=91 // pred_region
          %s2353 = smul.u32 8, %s24
        $region100: #{_lambda_.1} parent=91 // pred_fallthru
          _
        // Predicated region
        $region101: #{_lambda_.1} parent=91 // pred_check
          %p2354 = pneg %p219
        $region102: #{_lambda_.1} parent=91 // pred_check_branch
          %2356 = sbr.rel (%p2354) target = $region104
        $region103: #{_lambda_.1} parent=91 // pred_region
          %s2357 = smul.u32 8, %s24
        $region104: #{_lambda_.1} parent=91 // pred_fallthru
          _
      $region92: #{_lambda_.1} parent=5 // pred_fallthru
        _
      %p2358 = scmp.le.s32.totalorder 2, %s14
      // Predicated region
      $region105: #{_lambda_.1} parent=5 // pred_check
        %p2359 = pneg %p2358
      $region106: #{_lambda_.1} parent=5 // pred_check_branch
        %2361 = sbr.rel (%p2359) target = $region108
      $region107: #{_lambda_.1} parent=5 // pred_region
        %s2362 = ssub.s32 %s14, 2
        // Predicated region
        $region109: #{_lambda_.1} parent=107 // pred_check
          %p2363 = pneg %p197
        $region110: #{_lambda_.1} parent=107 // pred_check_branch
          %2365 = sbr.rel (%p2363) target = $region112
        $region111: #{_lambda_.1} parent=107 // pred_region
          %s2366 = smul.u32 8, %s26
          %p2367 = scmp.lt.s32.totalorder %s25, 1
          %s2368 = scalar_select %p2367, %s25, 1
          %p2369 = scmp.lt.s32.totalorder %s2366, 7
          %s2370 = scalar_select %p2369, %s2366, 7
          %s2371 = smul.addr %s2368, 8
          %s2372 = sadd.s32 %s2370, %s2371
          %s2373 = smul.addr %s2372, 8
          %s2374 = scalar_lea.vmem %s6, %s2373
        $region112: #{_lambda_.1} parent=107 // pred_fallthru
          _
        // Predicated region
        $region113: #{_lambda_.1} parent=107 // pred_check
          %p2375 = pneg %p225
        $region114: #{_lambda_.1} parent=107 // pred_check_branch
          %2377 = sbr.rel (%p2375) target = $region116
        $region115: #{_lambda_.1} parent=107 // pred_region
          %s2378 = smul.u32 8, %s26
          %p2379 = scmp.lt.s32.totalorder %s25, 1
          %s2380 = scalar_select %p2379, %s25, 1
          %p2381 = scmp.lt.s32.totalorder %s2378, 7
          %s2382 = scalar_select %p2381, %s2378, 7
          %s2383 = smul.addr %s2380, 8
          %s2384 = sadd.s32 %s2382, %s2383
          %s2385 = smul.addr %s2384, 8
          %s2386 = scalar_lea.vmem %s7, %s2385
        $region116: #{_lambda_.1} parent=107 // pred_fallthru
          _
      $region108: #{_lambda_.1} parent=5 // pred_fallthru
        _
    $region6: #{_lambda_.1} parent=1 // loop_footer
      %s18 = sadd.s32 1, %s14
    $region7: #{_lambda_.1} parent=1 // loop_footer_branch
      %13 = sbr.rel target = $region3
    $region8: #{_lambda_.1} parent=1 // loop_exit
      _

</llo_original>
